<compile_context>
chip_gen: v7x
topology: tpu7x:2x2x1
jax: 0.10.0
libtpu: 0.0.40
codegen_flags: <defaults>
</compile_context>

<pallas_src>
import jax
import jax.numpy as jnp
from jax.experimental import pallas as pl
from jax.experimental.pallas import tpu as pltpu
import numpy as np

H1, H2 = 512, 256          # hidden sizes fixed by the module spec
H3_PAD = 128               # lane-dense padding of the 1-wide final layer


def _leaky_relu(x, slope=0.2):
    return jnp.where(x > 0, x, slope * x)


def discriminator_kernel(x_ref, w1_ref, b1_ref, w2_ref, b2_ref, w3_ref, b3_ref,
                         out_ref, acc_ref):
    # grid = (batch tiles, K tiles of d_in); K is the innermost (reduction) axis.
    k = pl.program_id(1)

    @pl.when(k == 0)
    def _():
        acc_ref[...] = jnp.zeros_like(acc_ref)

    # Layer 1 partial product: bf16 x bf16 -> f32 accumulation on the MXU.
    acc_ref[...] += jnp.dot(x_ref[...], w1_ref[...],
                            preferred_element_type=jnp.float32)

    @pl.when(k == pl.num_programs(1) - 1)
    def _():
        # Epilogue (runs once per batch tile): f32 bias + LeakyReLU, layers 2 & 3.
        h1 = _leaky_relu(acc_ref[...] + b1_ref[...])                       # (TM, 512) f32
        h2 = jnp.dot(h1.astype(jnp.bfloat16), w2_ref[...],
                     preferred_element_type=jnp.float32)                   # (TM, 256)
        h2 = _leaky_relu(h2 + b2_ref[...])
        out = jnp.dot(h2.astype(jnp.bfloat16), w3_ref[...],
                      preferred_element_type=jnp.float32)                  # (TM, 128)
        out_ref[...] = (out + b3_ref[...]).astype(out_ref.dtype)


def discriminator_forward(img, params):
    """img: (N, C, H, W) float32. Returns validity: (N, 1) float32."""
    w1, b1, w2, b2, w3, b3 = params
    n = img.shape[0]
    x = img.reshape(n, -1).astype(jnp.bfloat16)   # == img.view(N, -1), bf16 for HBM/MXU
    d_in = x.shape[1]
    assert w1.shape == (d_in, H1) and w2.shape == (H1, H2) and w3.shape == (H2, 1)

    def rup(a, m):
        return -(-a // m) * m

    # ---- batch tiling: >= 8 rows (sublane), cap at 256 rows per grid step ----
    n_pad = rup(max(n, 8), 8)
    tm = 256 if n_pad >= 256 else n_pad
    n_pad = rup(n_pad, tm)

    # ---- K tiling of d_in (layer 1) so large images still fit / pipeline ----
    if d_in <= 2048:
        tk = rup(d_in, 128)
        d_pad = tk
    else:
        tk = 2048
        d_pad = rup(d_in, tk)
    grid = (n_pad // tm, d_pad // tk)

    # Zero padding keeps the math identical.
    x_p = jnp.pad(x, ((0, n_pad - n), (0, d_pad - d_in)))
    w1_p = jnp.pad(w1, ((0, d_pad - d_in), (0, 0)))
    w3_p = jnp.pad(w3, ((0, 0), (0, H3_PAD - 1)))            # lane-dense last layer
    b3_p = jnp.pad(b3, ((0, 0), (0, H3_PAD - 1)))

    out = pl.pallas_call(
        discriminator_kernel,
        out_shape=jax.ShapeDtypeStruct((n_pad, H3_PAD), jnp.float32),
        grid=grid,
        in_specs=[
            pl.BlockSpec((tm, tk), lambda i, k: (i, k)),       # x tile (streamed)
            pl.BlockSpec((tk, H1), lambda i, k: (k, 0)),       # w1 K-slab (streamed over k)
            pl.BlockSpec((1, H1), lambda i, k: (0, 0)),        # b1 (resident)
            pl.BlockSpec((H1, H2), lambda i, k: (0, 0)),       # w2 (resident)
            pl.BlockSpec((1, H2), lambda i, k: (0, 0)),        # b2 (resident)
            pl.BlockSpec((H2, H3_PAD), lambda i, k: (0, 0)),   # w3 padded (resident)
            pl.BlockSpec((1, H3_PAD), lambda i, k: (0, 0)),    # b3 padded (resident)
        ],
        out_specs=pl.BlockSpec((tm, H3_PAD), lambda i, k: (i, 0)),
        scratch_shapes=[pltpu.VMEM((tm, H1), jnp.float32)],    # layer-1 f32 accumulator
        compiler_params=pltpu.CompilerParams(
            dimension_semantics=("parallel", "arbitrary"),
            vmem_limit_bytes=32 << 20),
    )(x_p, w1_p, b1, w2, b2, w3_p, b3_p)

    return out[:n, :1]


def init_params(key, d_in):
    """PyTorch-Linear-style init (uniform +/- 1/sqrt(fan_in)), weights stored (in, out)
    in bf16 (bandwidth / MXU-native), biases kept in f32."""
    def linear(key, fan_in, fan_out):
        kw, kb = jax.random.split(key)
        bound = 1.0 / np.sqrt(fan_in)
        w = jax.random.uniform(kw, (fan_in, fan_out), jnp.float32, -bound, bound)
        b = jax.random.uniform(kb, (1, fan_out), jnp.float32, -bound, bound)
        return w.astype(jnp.bfloat16), b

    k1, k2, k3 = jax.random.split(key, 3)
    w1, b1 = linear(k1, d_in, H1)
    w2, b2 = linear(k2, H1, H2)
    w3, b3 = linear(k3, H2, 1)
    return (w1, b1, w2, b2, w3, b3)


if __name__ == "__main__":
    key = jax.random.PRNGKey(0)
    k_img, k_par = jax.random.split(key)

    # Small shapes consistent with img_shape = (channels, img_size, img_size)
    N, C, H, W = 2, 4, 16, 16
    img = jax.random.normal(k_img, (N, C, H, W), jnp.float32)

    params = init_params(k_par, C * H * W)

    validity = jax.block_until_ready(discriminator_forward(img, params))

    # Reference in plain JAX (same bf16 parameters / input, f32 math).
    w1, b1, w2, b2, w3, b3 = params
    x = img.reshape(N, -1).astype(jnp.bfloat16).astype(jnp.float32)
    h1 = _leaky_relu(x @ w1.astype(jnp.float32) + b1)
    h2 = _leaky_relu(h1 @ w2.astype(jnp.float32) + b2)
    ref = h2 @ w3.astype(jnp.float32) + b3

    assert validity.shape == (N, 1)
    np.testing.assert_allclose(np.asarray(validity), np.asarray(ref),
                               rtol=2e-2, atol=2e-2)
    print("KERNEL_OK")
</pallas_src>

<mosaic_0001>
module attributes {stable_mosaic.version = 11 : i64} {
  func.func @discriminator_kernel(%arg0: i32, %arg1: i32, %arg2: memref<8x1024xbf16, #tpu.memory_space<vmem>>, %arg3: memref<1024x512xbf16, #tpu.memory_space<vmem>>, %arg4: memref<1x512xf32, #tpu.memory_space<vmem>>, %arg5: memref<512x256xbf16, #tpu.memory_space<vmem>>, %arg6: memref<1x256xf32, #tpu.memory_space<vmem>>, %arg7: memref<256x128xbf16, #tpu.memory_space<vmem>>, %arg8: memref<1x128xf32, #tpu.memory_space<vmem>>, %arg9: memref<8x128xf32, #tpu.memory_space<vmem>>, %arg10: memref<8x512xf32, #tpu.memory_space<vmem>>) attributes {dimension_semantics = [#tpu.dimension_semantics<parallel>, #tpu.dimension_semantics<arbitrary>], iteration_bounds = array<i64: 1, 1>, scalar_prefetch = 0 : i64, scratch_operands = 1 : i64, tpu.core_type = #tpu.core_type<tc>, window_params = [{transform_indices = @transform_0, window_bounds = array<i64: 8, 1024>}, {transform_indices = @transform_1, window_bounds = array<i64: 1024, 512>}, {pipeline_mode = #tpu.pipeline_mode<synchronous>, transform_indices = @transform_2, window_bounds = array<i64: 1, 512>}, {pipeline_mode = #tpu.pipeline_mode<synchronous>, transform_indices = @transform_3, window_bounds = array<i64: 512, 256>}, {pipeline_mode = #tpu.pipeline_mode<synchronous>, transform_indices = @transform_4, window_bounds = array<i64: 1, 256>}, {pipeline_mode = #tpu.pipeline_mode<synchronous>, transform_indices = @transform_5, window_bounds = array<i64: 256, 128>}, {pipeline_mode = #tpu.pipeline_mode<synchronous>, transform_indices = @transform_6, window_bounds = array<i64: 1, 128>}, {transform_indices = @transform_7, window_bounds = array<i64: 8, 128>}]} {
    %c0_i32 = arith.constant 0 : i32
    %0 = arith.cmpi eq, %arg1, %c0_i32 : i32
    %1 = arith.extui %0 : i1 to i32
    %c0_i32_0 = arith.constant 0 : i32
    %2 = arith.cmpi ne, %1, %c0_i32_0 : i32
    scf.if %2 {
      %cst_10 = arith.constant 0.000000e+00 : f32
      %12 = vector.broadcast %cst_10 : f32 to vector<8x512xf32>
      %c0_11 = arith.constant 0 : index
      %c0_12 = arith.constant 0 : index
      %13 = vector.load %arg10[%c0_11, %c0_12] : memref<8x512xf32, #tpu.memory_space<vmem>>, vector<8x512xf32>
      tpu.vector_store %arg10[%c0_11, %c0_12], %12 {strides = array<i32>} : memref<8x512xf32, #tpu.memory_space<vmem>>, vector<8x512xf32>,
    } else {
    }
    %c0 = arith.constant 0 : index
    %c0_1 = arith.constant 0 : index
    %3 = vector.load %arg10[%c0, %c0_1] : memref<8x512xf32, #tpu.memory_space<vmem>>, vector<8x512xf32>
    %c0_2 = arith.constant 0 : index
    %c0_3 = arith.constant 0 : index
    %4 = vector.load %arg2[%c0_2, %c0_3] : memref<8x1024xbf16, #tpu.memory_space<vmem>>, vector<8x1024xbf16>
    %c0_4 = arith.constant 0 : index
    %c0_5 = arith.constant 0 : index
    %5 = vector.load %arg3[%c0_4, %c0_5] : memref<1024x512xbf16, #tpu.memory_space<vmem>>, vector<1024x512xbf16>
    %cst = arith.constant dense<0.000000e+00> : vector<8x512xf32>
    %6 = tpu.matmul %4, %5, %cst {dimension_numbers = #tpu.dot_dimension_numbers<[1], [0], [0], [1], [0, 0, 1, 1], [], []>} : vector<8x1024xbf16>, vector<1024x512xbf16>, vector<8x512xf32> -> vector<8x512xf32>
    %7 = arith.addf %3, %6 : vector<8x512xf32>
    %c0_6 = arith.constant 0 : index
    %c0_7 = arith.constant 0 : index
    %8 = vector.load %arg10[%c0_6, %c0_7] : memref<8x512xf32, #tpu.memory_space<vmem>>, vector<8x512xf32>
    tpu.vector_store %arg10[%c0_6, %c0_7], %7 {strides = array<i32>} : memref<8x512xf32, #tpu.memory_space<vmem>>, vector<8x512xf32>,
    %c0_i32_8 = arith.constant 0 : i32
    %9 = arith.cmpi eq, %arg1, %c0_i32_8 : i32
    %10 = arith.extui %9 : i1 to i32
    %c0_i32_9 = arith.constant 0 : i32
    %11 = arith.cmpi ne, %10, %c0_i32_9 : i32
    scf.if %11 {
      %c0_10 = arith.constant 0 : index
      %c0_11 = arith.constant 0 : index
      %12 = vector.load %arg10[%c0_10, %c0_11] : memref<8x512xf32, #tpu.memory_space<vmem>>, vector<8x512xf32>
      %c0_12 = arith.constant 0 : index
      %c0_13 = arith.constant 0 : index
      %13 = vector.load %arg4[%c0_12, %c0_13] : memref<1x512xf32, #tpu.memory_space<vmem>>, vector<1x512xf32>
      %14 = vector.broadcast %13 : vector<1x512xf32> to vector<8x512xf32>
      %15 = arith.addf %12, %14 : vector<8x512xf32>
      %cst_14 = arith.constant 0.000000e+00 : f32
      %16 = vector.broadcast %cst_14 : f32 to vector<8x512xf32>
      %17 = arith.cmpf ogt, %15, %16 : vector<8x512xf32>
      %cst_15 = arith.constant 2.000000e-01 : f32
      %18 = vector.broadcast %cst_15 : f32 to vector<8x512xf32>
      %19 = arith.mulf %18, %15 : vector<8x512xf32>
      %20 = arith.select %17, %15, %19 : vector<8x512xi1>, vector<8x512xf32>
      %21 = arith.truncf %20 : vector<8x512xf32> to vector<8x512xbf16>
      %c0_16 = arith.constant 0 : index
      %c0_17 = arith.constant 0 : index
      %22 = vector.load %arg5[%c0_16, %c0_17] : memref<512x256xbf16, #tpu.memory_space<vmem>>, vector<512x256xbf16>
      %cst_18 = arith.constant dense<0.000000e+00> : vector<8x256xf32>
      %23 = tpu.matmul %21, %22, %cst_18 {dimension_numbers = #tpu.dot_dimension_numbers<[1], [0], [0], [1], [0, 0, 1, 1], [], []>} : vector<8x512xbf16>, vector<512x256xbf16>, vector<8x256xf32> -> vector<8x256xf32>
      %c0_19 = arith.constant 0 : index
      %c0_20 = arith.constant 0 : index
      %24 = vector.load %arg6[%c0_19, %c0_20] : memref<1x256xf32, #tpu.memory_space<vmem>>, vector<1x256xf32>
      %25 = vector.broadcast %24 : vector<1x256xf32> to vector<8x256xf32>
      %26 = arith.addf %23, %25 : vector<8x256xf32>
      %cst_21 = arith.constant 0.000000e+00 : f32
      %27 = vector.broadcast %cst_21 : f32 to vector<8x256xf32>
      %28 = arith.cmpf ogt, %26, %27 : vector<8x256xf32>
      %cst_22 = arith.constant 2.000000e-01 : f32
      %29 = vector.broadcast %cst_22 : f32 to vector<8x256xf32>
      %30 = arith.mulf %29, %26 : vector<8x256xf32>
      %31 = arith.select %28, %26, %30 : vector<8x256xi1>, vector<8x256xf32>
      %32 = arith.truncf %31 : vector<8x256xf32> to vector<8x256xbf16>
      %c0_23 = arith.constant 0 : index
      %c0_24 = arith.constant 0 : index
      %33 = vector.load %arg7[%c0_23, %c0_24] : memref<256x128xbf16, #tpu.memory_space<vmem>>, vector<256x128xbf16>
      %cst_25 = arith.constant dense<0.000000e+00> : vector<8x128xf32>
      %34 = tpu.matmul %32, %33, %cst_25 {dimension_numbers = #tpu.dot_dimension_numbers<[1], [0], [0], [1], [0, 0, 1, 1], [], []>} : vector<8x256xbf16>, vector<256x128xbf16>, vector<8x128xf32> -> vector<8x128xf32>
      %c0_26 = arith.constant 0 : index
      %c0_27 = arith.constant 0 : index
      %35 = vector.load %arg8[%c0_26, %c0_27] : memref<1x128xf32, #tpu.memory_space<vmem>>, vector<1x128xf32>
      %36 = vector.broadcast %35 : vector<1x128xf32> to vector<8x128xf32>
      %37 = arith.addf %34, %36 : vector<8x128xf32>
      %c0_28 = arith.constant 0 : index
      %c0_29 = arith.constant 0 : index
      %38 = vector.load %arg9[%c0_28, %c0_29] : memref<8x128xf32, #tpu.memory_space<vmem>>, vector<8x128xf32>
      tpu.vector_store %arg9[%c0_28, %c0_29], %37 {strides = array<i32>} : memref<8x128xf32, #tpu.memory_space<vmem>>, vector<8x128xf32>,
    } else {
    }
    return
  }
  func.func @transform_0(%arg0: i32, %arg1: i32) -> (i32, i32) {
    %c0_i32 = arith.constant 0 : i32
    return %arg0, %arg1 : i32, i32
  }
  func.func @transform_1(%arg0: i32, %arg1: i32) -> (i32, i32) {
    %c0_i32 = arith.constant 0 : i32
    %c0_i32_0 = arith.constant 0 : i32
    return %arg1, %c0_i32 : i32, i32
  }
  func.func @transform_2(%arg0: i32, %arg1: i32) -> (i32, i32) {
    %c0_i32 = arith.constant 0 : i32
    %c0_i32_0 = arith.constant 0 : i32
    %c0_i32_1 = arith.constant 0 : i32
    return %c0_i32, %c0_i32_0 : i32, i32
  }
  func.func @transform_3(%arg0: i32, %arg1: i32) -> (i32, i32) {
    %c0_i32 = arith.constant 0 : i32
    %c0_i32_0 = arith.constant 0 : i32
    %c0_i32_1 = arith.constant 0 : i32
    return %c0_i32, %c0_i32_0 : i32, i32
  }
  func.func @transform_4(%arg0: i32, %arg1: i32) -> (i32, i32) {
    %c0_i32 = arith.constant 0 : i32
    %c0_i32_0 = arith.constant 0 : i32
    %c0_i32_1 = arith.constant 0 : i32
    return %c0_i32, %c0_i32_0 : i32, i32
  }
  func.func @transform_5(%arg0: i32, %arg1: i32) -> (i32, i32) {
    %c0_i32 = arith.constant 0 : i32
    %c0_i32_0 = arith.constant 0 : i32
    %c0_i32_1 = arith.constant 0 : i32
    return %c0_i32, %c0_i32_0 : i32, i32
  }
  func.func @transform_6(%arg0: i32, %arg1: i32) -> (i32, i32) {
    %c0_i32 = arith.constant 0 : i32
    %c0_i32_0 = arith.constant 0 : i32
    %c0_i32_1 = arith.constant 0 : i32
    return %c0_i32, %c0_i32_0 : i32, i32
  }
  func.func @transform_7(%arg0: i32, %arg1: i32) -> (i32, i32) {
    %c0_i32 = arith.constant 0 : i32
    %c0_i32_0 = arith.constant 0 : i32
    return %arg0, %c0_i32 : i32, i32
  }
}

</mosaic_0001>

<llo_original>
// kernel: tpu_custom_call.1
$region0: #{tpu_custom_call.1}
  #allocation0 [shape = 'u32[]', space=smem, size = 0x4, offset = 0x4, fixed_abs, tag = 'smem constant byte address 0x4 - core index']
  #allocation1 [shape = 'u32[144,128]{1,0:T(1,128)}', space=vmem, size = 0x12000, scoped, tag = 'internal scratch']
  #allocation2 [shape = 'f32[8,512]{1,0:T(8,128)}', space=vmem, size = 0x4000, scoped, tag = 'scratch operand']
  %s0 = inlined_call_operand.hbm [shape: bf16[8,1024], index: 0, kind: input, shape index: {}]
  %s1 = inlined_call_operand.hbm [shape: bf16[1024,512], index: 1, kind: input, shape index: {}]
  %s2 = inlined_call_operand.vmem [shape: f32[1,512], index: 2, kind: input, shape index: {}]
  %s3 = inlined_call_operand.hbm [shape: bf16[512,256], index: 3, kind: input, shape index: {}]
  %s4 = inlined_call_operand.vmem [shape: f32[1,256], index: 4, kind: input, shape index: {}]
  %s5 = inlined_call_operand.hbm [shape: bf16[256,128], index: 5, kind: input, shape index: {}]
  %s6 = inlined_call_operand.vmem [shape: f32[1,128], index: 6, kind: input, shape index: {}]
  %s7 = inlined_call_operand.hbm [shape: f32[8,128], index: 7, kind: output, shape index: {}]
  %s8 = sld [smem:[#allocation0]]
  $region62: #{tpu_custom_call.1} parent=0
    _
  %s10 = ssub.s32 1, %s8
  %s11 = scalar_select 0, %s10, %s8
  $region1: #{tpu_custom_call.1} parent=0
    #allocation3 [shape = 'u8[16384]{0}', space=vmem, size = 0x4000, scoped, tag = 'input window, operand 0, single buffered']
    #allocation4 [shape = 's32[1]{0}', space=sflag, size = 0x4, scoped, tag = 'scoped memory for tpu_custom_call.1']
    #allocation5 [shape = 's32[1]{0}', space=sflag, size = 0x4, scoped, tag = 'scoped memory for tpu_custom_call.1']
    #allocation6 [shape = 'u8[1048576]{0}', space=vmem, size = 0x100000, scoped, tag = 'input window, operand 1, single buffered']
    #allocation7 [shape = 's32[1]{0}', space=sflag, size = 0x4, scoped, tag = 'scoped memory for tpu_custom_call.1']
    #allocation8 [shape = 'u8[262144]{0}', space=vmem, size = 0x40000, scoped, tag = 'input window, operand 3, single buffered']
    #allocation9 [shape = 'u8[65536]{0}', space=vmem, size = 0x10000, scoped, tag = 'input window, operand 5, single buffered']
    #allocation10 [shape = 's32[1]{0}', space=sflag, size = 0x4, scoped, tag = 'scoped memory for tpu_custom_call.1']
    #allocation11 [shape = 'u8[4096]{0}', space=vmem, size = 0x1000, scoped, tag = 'output window, operand 0, single buffered']
    %12 = vsyncpa [#allocation4], 0
    %13 = vsyncpa [#allocation7], 0
    %14 = vsyncpa [#allocation10], 0
    %15 = vsyncpa [#allocation5], 0
    // Predicated region
    $region2: #{tpu_custom_call.1} parent=1 // pred_check
      _
    $region3: #{tpu_custom_call.1} parent=1 // pred_check_branch
      %17 = sbr.rel (0) target = $region5
    $region4: #{tpu_custom_call.1} parent=1 // pred_region
      %s19 = ssub.s32 512, 512
      %20 = vsyncadd [#allocation4], %s19
      %s22 = sshll.u32 [#allocation3], 4
      %s23 = int_to_ptr.vmem [resolvable:$true] %s22
      %25 = dma.hbm_to_vmem [thread:$0]  %s0, 512, %s23, [#allocation4]
    $region5: #{tpu_custom_call.1} parent=1 // pred_fallthru
      _
    // Predicated region
    $region6: #{tpu_custom_call.1} parent=1 // pred_check
      _
    $region7: #{tpu_custom_call.1} parent=1 // pred_check_branch
      %27 = sbr.rel (0) target = $region9
    $region8: #{tpu_custom_call.1} parent=1 // pred_region
      %s29 = ssub.s32 32768, 32768
      %30 = vsyncadd [#allocation7], %s29
      %s31 = sshll.u32 [#allocation6], 4
      %s32 = int_to_ptr.vmem [resolvable:$true] %s31
      %37 = dma.hbm_to_vmem [thread:$0]  %s1, 32768, %s32, [#allocation7], 256, 256, 16
    $region9: #{tpu_custom_call.1} parent=1 // pred_fallthru
      _
    // Predicated region
    $region10: #{tpu_custom_call.1} parent=1 // pred_check
      _
    $region11: #{tpu_custom_call.1} parent=1 // pred_check_branch
      %39 = sbr.rel (0) target = $region13
    $region12: #{tpu_custom_call.1} parent=1 // pred_region
      _
    $region13: #{tpu_custom_call.1} parent=1 // pred_fallthru
      _
    // Predicated region
    $region14: #{tpu_custom_call.1} parent=1 // pred_check
      _
    $region15: #{tpu_custom_call.1} parent=1 // pred_check_branch
      %41 = sbr.rel (0) target = $region17
    $region16: #{tpu_custom_call.1} parent=1 // pred_region
      %s43 = ssub.s32 8192, 8192
      %44 = vsyncadd [#allocation7], %s43
      %s45 = sshll.u32 [#allocation8], 4
      %s46 = int_to_ptr.vmem [resolvable:$true] %s45
      %51 = dma.hbm_to_vmem [thread:$0]  %s3, 8192, %s46, [#allocation7], 128, 128, 8
    $region17: #{tpu_custom_call.1} parent=1 // pred_fallthru
      _
    // Predicated region
    $region18: #{tpu_custom_call.1} parent=1 // pred_check
      _
    $region19: #{tpu_custom_call.1} parent=1 // pred_check_branch
      %53 = sbr.rel (0) target = $region21
    $region20: #{tpu_custom_call.1} parent=1 // pred_region
      _
    $region21: #{tpu_custom_call.1} parent=1 // pred_fallthru
      _
    // Predicated region
    $region22: #{tpu_custom_call.1} parent=1 // pred_check
      _
    $region23: #{tpu_custom_call.1} parent=1 // pred_check_branch
      %55 = sbr.rel (0) target = $region25
    $region24: #{tpu_custom_call.1} parent=1 // pred_region
      %s57 = ssub.s32 2048, 2048
      %58 = vsyncadd [#allocation10], %s57
      %s59 = sshll.u32 [#allocation9], 4
      %s60 = int_to_ptr.vmem [resolvable:$true] %s59
      %65 = dma.hbm_to_vmem [thread:$0]  %s5, 2048, %s60, [#allocation10], 64, 64, 4
    $region25: #{tpu_custom_call.1} parent=1 // pred_fallthru
      _
    // Predicated region
    $region26: #{tpu_custom_call.1} parent=1 // pred_check
      _
    $region27: #{tpu_custom_call.1} parent=1 // pred_check_branch
      %67 = sbr.rel (0) target = $region29
    $region28: #{tpu_custom_call.1} parent=1 // pred_region
      _
    $region29: #{tpu_custom_call.1} parent=1 // pred_fallthru
      _
    // Predicated region
    $region30: #{tpu_custom_call.1} parent=1 // pred_check
      _
    $region31: #{tpu_custom_call.1} parent=1 // pred_check_branch
      %69 = sbr.rel (0) target = $region33
    $region32: #{tpu_custom_call.1} parent=1 // pred_region
      %70 = dma.done [#allocation4], 512
    $region33: #{tpu_custom_call.1} parent=1 // pred_fallthru
      _
    // Predicated region
    $region34: #{tpu_custom_call.1} parent=1 // pred_check
      _
    $region35: #{tpu_custom_call.1} parent=1 // pred_check_branch
      %72 = sbr.rel (0) target = $region37
    $region36: #{tpu_custom_call.1} parent=1 // pred_region
      %73 = dma.done [#allocation7], 32768
    $region37: #{tpu_custom_call.1} parent=1 // pred_fallthru
      _
    // Predicated region
    $region38: #{tpu_custom_call.1} parent=1 // pred_check
      _
    $region39: #{tpu_custom_call.1} parent=1 // pred_check_branch
      %75 = sbr.rel (0) target = $region41
    $region40: #{tpu_custom_call.1} parent=1 // pred_region
      %76 = dma.done [#allocation7], 8192
    $region41: #{tpu_custom_call.1} parent=1 // pred_fallthru
      _
    // Predicated region
    $region42: #{tpu_custom_call.1} parent=1 // pred_check
      _
    $region43: #{tpu_custom_call.1} parent=1 // pred_check_branch
      %78 = sbr.rel (0) target = $region45
    $region44: #{tpu_custom_call.1} parent=1 // pred_region
      %79 = dma.done [#allocation10], 2048
    $region45: #{tpu_custom_call.1} parent=1 // pred_fallthru
      _
    %p81 = scmp.eq.s32.totalorder 0, 0
    // Predicated region
    $region46: #{tpu_custom_call.1} parent=1 // pred_check
      %p82 = pneg %p81
    $region47: #{tpu_custom_call.1} parent=1 // pred_check_branch
      %84 = sbr.rel (%p82) target = $region49
    $region48: #{tpu_custom_call.1} parent=1 // pred_region
      %85 = vst [vmem:[#allocation2] sm:$0xff] 0.0
      %86 = vst [vmem:[#allocation2 + $0x8] sm:$0xff] 0.0
      %87 = vst [vmem:[#allocation2 + $0x10] sm:$0xff] 0.0
      %88 = vst [vmem:[#allocation2 + $0x18] sm:$0xff] 0.0
    $region49: #{tpu_custom_call.1} parent=1 // pred_fallthru
      _
    %v89 = vld [vmem:[#allocation2] sm:$0xff]
    %v90 = vld [vmem:[#allocation2 + $0x8] sm:$0xff]
    %v91 = vld [vmem:[#allocation2 + $0x10] sm:$0xff]
    %v92 = vld [vmem:[#allocation2 + $0x18] sm:$0xff]
    %v93 = vld [vmem:[#allocation3] sm:$0xff]
    %v94 = vld [vmem:[#allocation3 + $0x8] sm:$0xff]
    %v95 = vld [vmem:[#allocation3 + $0x10] sm:$0xff]
    %v96 = vld [vmem:[#allocation3 + $0x18] sm:$0xff]
    %v97 = vld [vmem:[#allocation6] sm:$0xff]
    %v98 = vld [vmem:[#allocation6 + $0x8] sm:$0xff]
    %v99 = vld [vmem:[#allocation6 + $0x10] sm:$0xff]
    %v100 = vld [vmem:[#allocation6 + $0x18] sm:$0xff]
    %v101 = vld [vmem:[#allocation6 + $0x20] sm:$0xff]
    %v102 = vld [vmem:[#allocation6 + $0x28] sm:$0xff]
    %v103 = vld [vmem:[#allocation6 + $0x30] sm:$0xff]
    %v104 = vld [vmem:[#allocation6 + $0x38] sm:$0xff]
    %v105 = vld [vmem:[#allocation6 + $0x40] sm:$0xff]
    %v106 = vld [vmem:[#allocation6 + $0x48] sm:$0xff]
    %v107 = vld [vmem:[#allocation6 + $0x50] sm:$0xff]
    %v108 = vld [vmem:[#allocation6 + $0x58] sm:$0xff]
    %v109 = vld [vmem:[#allocation6 + $0x60] sm:$0xff]
    %v110 = vld [vmem:[#allocation6 + $0x68] sm:$0xff]
    %v111 = vld [vmem:[#allocation6 + $0x70] sm:$0xff]
    %v112 = vld [vmem:[#allocation6 + $0x78] sm:$0xff]
    %v113 = vld [vmem:[#allocation6 + $0x80] sm:$0xff]
    %v114 = vld [vmem:[#allocation6 + $0x88] sm:$0xff]
    %v115 = vld [vmem:[#allocation6 + $0x90] sm:$0xff]
    %v116 = vld [vmem:[#allocation6 + $0x98] sm:$0xff]
    %v117 = vld [vmem:[#allocation6 + $0xa0] sm:$0xff]
    %v118 = vld [vmem:[#allocation6 + $0xa8] sm:$0xff]
    %v119 = vld [vmem:[#allocation6 + $0xb0] sm:$0xff]
    %v120 = vld [vmem:[#allocation6 + $0xb8] sm:$0xff]
    %v121 = vld [vmem:[#allocation6 + $0xc0] sm:$0xff]
    %v122 = vld [vmem:[#allocation6 + $0xc8] sm:$0xff]
    %v123 = vld [vmem:[#allocation6 + $0xd0] sm:$0xff]
    %v124 = vld [vmem:[#allocation6 + $0xd8] sm:$0xff]
    %v125 = vld [vmem:[#allocation6 + $0xe0] sm:$0xff]
    %v126 = vld [vmem:[#allocation6 + $0xe8] sm:$0xff]
    %v127 = vld [vmem:[#allocation6 + $0xf0] sm:$0xff]
    %v128 = vld [vmem:[#allocation6 + $0xf8] sm:$0xff]
    %v129 = vld [vmem:[#allocation6 + $0x100] sm:$0xff]
    %v130 = vld [vmem:[#allocation6 + $0x108] sm:$0xff]
    %v131 = vld [vmem:[#allocation6 + $0x110] sm:$0xff]
    %v132 = vld [vmem:[#allocation6 + $0x118] sm:$0xff]
    %v133 = vld [vmem:[#allocation6 + $0x120] sm:$0xff]
    %v134 = vld [vmem:[#allocation6 + $0x128] sm:$0xff]
    %v135 = vld [vmem:[#allocation6 + $0x130] sm:$0xff]
    %v136 = vld [vmem:[#allocation6 + $0x138] sm:$0xff]
    %v137 = vld [vmem:[#allocation6 + $0x140] sm:$0xff]
    %v138 = vld [vmem:[#allocation6 + $0x148] sm:$0xff]
    %v139 = vld [vmem:[#allocation6 + $0x150] sm:$0xff]
    %v140 = vld [vmem:[#allocation6 + $0x158] sm:$0xff]
    %v141 = vld [vmem:[#allocation6 + $0x160] sm:$0xff]
    %v142 = vld [vmem:[#allocation6 + $0x168] sm:$0xff]
    %v143 = vld [vmem:[#allocation6 + $0x170] sm:$0xff]
    %v144 = vld [vmem:[#allocation6 + $0x178] sm:$0xff]
    %v145 = vld [vmem:[#allocation6 + $0x180] sm:$0xff]
    %v146 = vld [vmem:[#allocation6 + $0x188] sm:$0xff]
    %v147 = vld [vmem:[#allocation6 + $0x190] sm:$0xff]
    %v148 = vld [vmem:[#allocation6 + $0x198] sm:$0xff]
    %v149 = vld [vmem:[#allocation6 + $0x1a0] sm:$0xff]
    %v150 = vld [vmem:[#allocation6 + $0x1a8] sm:$0xff]
    %v151 = vld [vmem:[#allocation6 + $0x1b0] sm:$0xff]
    %v152 = vld [vmem:[#allocation6 + $0x1b8] sm:$0xff]
    %v153 = vld [vmem:[#allocation6 + $0x1c0] sm:$0xff]
    %v154 = vld [vmem:[#allocation6 + $0x1c8] sm:$0xff]
    %v155 = vld [vmem:[#allocation6 + $0x1d0] sm:$0xff]
    %v156 = vld [vmem:[#allocation6 + $0x1d8] sm:$0xff]
    %v157 = vld [vmem:[#allocation6 + $0x1e0] sm:$0xff]
    %v158 = vld [vmem:[#allocation6 + $0x1e8] sm:$0xff]
    %v159 = vld [vmem:[#allocation6 + $0x1f0] sm:$0xff]
    %v160 = vld [vmem:[#allocation6 + $0x1f8] sm:$0xff]
    %v161 = vld [vmem:[#allocation6 + $0x200] sm:$0xff]
    %v162 = vld [vmem:[#allocation6 + $0x208] sm:$0xff]
    %v163 = vld [vmem:[#allocation6 + $0x210] sm:$0xff]
    %v164 = vld [vmem:[#allocation6 + $0x218] sm:$0xff]
    %v165 = vld [vmem:[#allocation6 + $0x220] sm:$0xff]
    %v166 = vld [vmem:[#allocation6 + $0x228] sm:$0xff]
    %v167 = vld [vmem:[#allocation6 + $0x230] sm:$0xff]
    %v168 = vld [vmem:[#allocation6 + $0x238] sm:$0xff]
    %v169 = vld [vmem:[#allocation6 + $0x240] sm:$0xff]
    %v170 = vld [vmem:[#allocation6 + $0x248] sm:$0xff]
    %v171 = vld [vmem:[#allocation6 + $0x250] sm:$0xff]
    %v172 = vld [vmem:[#allocation6 + $0x258] sm:$0xff]
    %v173 = vld [vmem:[#allocation6 + $0x260] sm:$0xff]
    %v174 = vld [vmem:[#allocation6 + $0x268] sm:$0xff]
    %v175 = vld [vmem:[#allocation6 + $0x270] sm:$0xff]
    %v176 = vld [vmem:[#allocation6 + $0x278] sm:$0xff]
    %v177 = vld [vmem:[#allocation6 + $0x280] sm:$0xff]
    %v178 = vld [vmem:[#allocation6 + $0x288] sm:$0xff]
    %v179 = vld [vmem:[#allocation6 + $0x290] sm:$0xff]
    %v180 = vld [vmem:[#allocation6 + $0x298] sm:$0xff]
    %v181 = vld [vmem:[#allocation6 + $0x2a0] sm:$0xff]
    %v182 = vld [vmem:[#allocation6 + $0x2a8] sm:$0xff]
    %v183 = vld [vmem:[#allocation6 + $0x2b0] sm:$0xff]
    %v184 = vld [vmem:[#allocation6 + $0x2b8] sm:$0xff]
    %v185 = vld [vmem:[#allocation6 + $0x2c0] sm:$0xff]
    %v186 = vld [vmem:[#allocation6 + $0x2c8] sm:$0xff]
    %v187 = vld [vmem:[#allocation6 + $0x2d0] sm:$0xff]
    %v188 = vld [vmem:[#allocation6 + $0x2d8] sm:$0xff]
    %v189 = vld [vmem:[#allocation6 + $0x2e0] sm:$0xff]
    %v190 = vld [vmem:[#allocation6 + $0x2e8] sm:$0xff]
    %v191 = vld [vmem:[#allocation6 + $0x2f0] sm:$0xff]
    %v192 = vld [vmem:[#allocation6 + $0x2f8] sm:$0xff]
    %v193 = vld [vmem:[#allocation6 + $0x300] sm:$0xff]
    %v194 = vld [vmem:[#allocation6 + $0x308] sm:$0xff]
    %v195 = vld [vmem:[#allocation6 + $0x310] sm:$0xff]
    %v196 = vld [vmem:[#allocation6 + $0x318] sm:$0xff]
    %v197 = vld [vmem:[#allocation6 + $0x320] sm:$0xff]
    %v198 = vld [vmem:[#allocation6 + $0x328] sm:$0xff]
    %v199 = vld [vmem:[#allocation6 + $0x330] sm:$0xff]
    %v200 = vld [vmem:[#allocation6 + $0x338] sm:$0xff]
    %v201 = vld [vmem:[#allocation6 + $0x340] sm:$0xff]
    %v202 = vld [vmem:[#allocation6 + $0x348] sm:$0xff]
    %v203 = vld [vmem:[#allocation6 + $0x350] sm:$0xff]
    %v204 = vld [vmem:[#allocation6 + $0x358] sm:$0xff]
    %v205 = vld [vmem:[#allocation6 + $0x360] sm:$0xff]
    %v206 = vld [vmem:[#allocation6 + $0x368] sm:$0xff]
    %v207 = vld [vmem:[#allocation6 + $0x370] sm:$0xff]
    %v208 = vld [vmem:[#allocation6 + $0x378] sm:$0xff]
    %v209 = vld [vmem:[#allocation6 + $0x380] sm:$0xff]
    %v210 = vld [vmem:[#allocation6 + $0x388] sm:$0xff]
    %v211 = vld [vmem:[#allocation6 + $0x390] sm:$0xff]
    %v212 = vld [vmem:[#allocation6 + $0x398] sm:$0xff]
    %v213 = vld [vmem:[#allocation6 + $0x3a0] sm:$0xff]
    %v214 = vld [vmem:[#allocation6 + $0x3a8] sm:$0xff]
    %v215 = vld [vmem:[#allocation6 + $0x3b0] sm:$0xff]
    %v216 = vld [vmem:[#allocation6 + $0x3b8] sm:$0xff]
    %v217 = vld [vmem:[#allocation6 + $0x3c0] sm:$0xff]
    %v218 = vld [vmem:[#allocation6 + $0x3c8] sm:$0xff]
    %v219 = vld [vmem:[#allocation6 + $0x3d0] sm:$0xff]
    %v220 = vld [vmem:[#allocation6 + $0x3d8] sm:$0xff]
    %v221 = vld [vmem:[#allocation6 + $0x3e0] sm:$0xff]
    %v222 = vld [vmem:[#allocation6 + $0x3e8] sm:$0xff]
    %v223 = vld [vmem:[#allocation6 + $0x3f0] sm:$0xff]
    %v224 = vld [vmem:[#allocation6 + $0x3f8] sm:$0xff]
    %v225 = vld [vmem:[#allocation6 + $0x400] sm:$0xff]
    %v226 = vld [vmem:[#allocation6 + $0x408] sm:$0xff]
    %v227 = vld [vmem:[#allocation6 + $0x410] sm:$0xff]
    %v228 = vld [vmem:[#allocation6 + $0x418] sm:$0xff]
    %v229 = vld [vmem:[#allocation6 + $0x420] sm:$0xff]
    %v230 = vld [vmem:[#allocation6 + $0x428] sm:$0xff]
    %v231 = vld [vmem:[#allocation6 + $0x430] sm:$0xff]
    %v232 = vld [vmem:[#allocation6 + $0x438] sm:$0xff]
    %v233 = vld [vmem:[#allocation6 + $0x440] sm:$0xff]
    %v234 = vld [vmem:[#allocation6 + $0x448] sm:$0xff]
    %v235 = vld [vmem:[#allocation6 + $0x450] sm:$0xff]
    %v236 = vld [vmem:[#allocation6 + $0x458] sm:$0xff]
    %v237 = vld [vmem:[#allocation6 + $0x460] sm:$0xff]
    %v238 = vld [vmem:[#allocation6 + $0x468] sm:$0xff]
    %v239 = vld [vmem:[#allocation6 + $0x470] sm:$0xff]
    %v240 = vld [vmem:[#allocation6 + $0x478] sm:$0xff]
    %v241 = vld [vmem:[#allocation6 + $0x480] sm:$0xff]
    %v242 = vld [vmem:[#allocation6 + $0x488] sm:$0xff]
    %v243 = vld [vmem:[#allocation6 + $0x490] sm:$0xff]
    %v244 = vld [vmem:[#allocation6 + $0x498] sm:$0xff]
    %v245 = vld [vmem:[#allocation6 + $0x4a0] sm:$0xff]
    %v246 = vld [vmem:[#allocation6 + $0x4a8] sm:$0xff]
    %v247 = vld [vmem:[#allocation6 + $0x4b0] sm:$0xff]
    %v248 = vld [vmem:[#allocation6 + $0x4b8] sm:$0xff]
    %v249 = vld [vmem:[#allocation6 + $0x4c0] sm:$0xff]
    %v250 = vld [vmem:[#allocation6 + $0x4c8] sm:$0xff]
    %v251 = vld [vmem:[#allocation6 + $0x4d0] sm:$0xff]
    %v252 = vld [vmem:[#allocation6 + $0x4d8] sm:$0xff]
    %v253 = vld [vmem:[#allocation6 + $0x4e0] sm:$0xff]
    %v254 = vld [vmem:[#allocation6 + $0x4e8] sm:$0xff]
    %v255 = vld [vmem:[#allocation6 + $0x4f0] sm:$0xff]
    %v256 = vld [vmem:[#allocation6 + $0x4f8] sm:$0xff]
    %v257 = vld [vmem:[#allocation6 + $0x500] sm:$0xff]
    %v258 = vld [vmem:[#allocation6 + $0x508] sm:$0xff]
    %v259 = vld [vmem:[#allocation6 + $0x510] sm:$0xff]
    %v260 = vld [vmem:[#allocation6 + $0x518] sm:$0xff]
    %v261 = vld [vmem:[#allocation6 + $0x520] sm:$0xff]
    %v262 = vld [vmem:[#allocation6 + $0x528] sm:$0xff]
    %v263 = vld [vmem:[#allocation6 + $0x530] sm:$0xff]
    %v264 = vld [vmem:[#allocation6 + $0x538] sm:$0xff]
    %v265 = vld [vmem:[#allocation6 + $0x540] sm:$0xff]
    %v266 = vld [vmem:[#allocation6 + $0x548] sm:$0xff]
    %v267 = vld [vmem:[#allocation6 + $0x550] sm:$0xff]
    %v268 = vld [vmem:[#allocation6 + $0x558] sm:$0xff]
    %v269 = vld [vmem:[#allocation6 + $0x560] sm:$0xff]
    %v270 = vld [vmem:[#allocation6 + $0x568] sm:$0xff]
    %v271 = vld [vmem:[#allocation6 + $0x570] sm:$0xff]
    %v272 = vld [vmem:[#allocation6 + $0x578] sm:$0xff]
    %v273 = vld [vmem:[#allocation6 + $0x580] sm:$0xff]
    %v274 = vld [vmem:[#allocation6 + $0x588] sm:$0xff]
    %v275 = vld [vmem:[#allocation6 + $0x590] sm:$0xff]
    %v276 = vld [vmem:[#allocation6 + $0x598] sm:$0xff]
    %v277 = vld [vmem:[#allocation6 + $0x5a0] sm:$0xff]
    %v278 = vld [vmem:[#allocation6 + $0x5a8] sm:$0xff]
    %v279 = vld [vmem:[#allocation6 + $0x5b0] sm:$0xff]
    %v280 = vld [vmem:[#allocation6 + $0x5b8] sm:$0xff]
    %v281 = vld [vmem:[#allocation6 + $0x5c0] sm:$0xff]
    %v282 = vld [vmem:[#allocation6 + $0x5c8] sm:$0xff]
    %v283 = vld [vmem:[#allocation6 + $0x5d0] sm:$0xff]
    %v284 = vld [vmem:[#allocation6 + $0x5d8] sm:$0xff]
    %v285 = vld [vmem:[#allocation6 + $0x5e0] sm:$0xff]
    %v286 = vld [vmem:[#allocation6 + $0x5e8] sm:$0xff]
    %v287 = vld [vmem:[#allocation6 + $0x5f0] sm:$0xff]
    %v288 = vld [vmem:[#allocation6 + $0x5f8] sm:$0xff]
    %v289 = vld [vmem:[#allocation6 + $0x600] sm:$0xff]
    %v290 = vld [vmem:[#allocation6 + $0x608] sm:$0xff]
    %v291 = vld [vmem:[#allocation6 + $0x610] sm:$0xff]
    %v292 = vld [vmem:[#allocation6 + $0x618] sm:$0xff]
    %v293 = vld [vmem:[#allocation6 + $0x620] sm:$0xff]
    %v294 = vld [vmem:[#allocation6 + $0x628] sm:$0xff]
    %v295 = vld [vmem:[#allocation6 + $0x630] sm:$0xff]
    %v296 = vld [vmem:[#allocation6 + $0x638] sm:$0xff]
    %v297 = vld [vmem:[#allocation6 + $0x640] sm:$0xff]
    %v298 = vld [vmem:[#allocation6 + $0x648] sm:$0xff]
    %v299 = vld [vmem:[#allocation6 + $0x650] sm:$0xff]
    %v300 = vld [vmem:[#allocation6 + $0x658] sm:$0xff]
    %v301 = vld [vmem:[#allocation6 + $0x660] sm:$0xff]
    %v302 = vld [vmem:[#allocation6 + $0x668] sm:$0xff]
    %v303 = vld [vmem:[#allocation6 + $0x670] sm:$0xff]
    %v304 = vld [vmem:[#allocation6 + $0x678] sm:$0xff]
    %v305 = vld [vmem:[#allocation6 + $0x680] sm:$0xff]
    %v306 = vld [vmem:[#allocation6 + $0x688] sm:$0xff]
    %v307 = vld [vmem:[#allocation6 + $0x690] sm:$0xff]
    %v308 = vld [vmem:[#allocation6 + $0x698] sm:$0xff]
    %v309 = vld [vmem:[#allocation6 + $0x6a0] sm:$0xff]
    %v310 = vld [vmem:[#allocation6 + $0x6a8] sm:$0xff]
    %v311 = vld [vmem:[#allocation6 + $0x6b0] sm:$0xff]
    %v312 = vld [vmem:[#allocation6 + $0x6b8] sm:$0xff]
    %v313 = vld [vmem:[#allocation6 + $0x6c0] sm:$0xff]
    %v314 = vld [vmem:[#allocation6 + $0x6c8] sm:$0xff]
    %v315 = vld [vmem:[#allocation6 + $0x6d0] sm:$0xff]
    %v316 = vld [vmem:[#allocation6 + $0x6d8] sm:$0xff]
    %v317 = vld [vmem:[#allocation6 + $0x6e0] sm:$0xff]
    %v318 = vld [vmem:[#allocation6 + $0x6e8] sm:$0xff]
    %v319 = vld [vmem:[#allocation6 + $0x6f0] sm:$0xff]
    %v320 = vld [vmem:[#allocation6 + $0x6f8] sm:$0xff]
    %v321 = vld [vmem:[#allocation6 + $0x700] sm:$0xff]
    %v322 = vld [vmem:[#allocation6 + $0x708] sm:$0xff]
    %v323 = vld [vmem:[#allocation6 + $0x710] sm:$0xff]
    %v324 = vld [vmem:[#allocation6 + $0x718] sm:$0xff]
    %v325 = vld [vmem:[#allocation6 + $0x720] sm:$0xff]
    %v326 = vld [vmem:[#allocation6 + $0x728] sm:$0xff]
    %v327 = vld [vmem:[#allocation6 + $0x730] sm:$0xff]
    %v328 = vld [vmem:[#allocation6 + $0x738] sm:$0xff]
    %v329 = vld [vmem:[#allocation6 + $0x740] sm:$0xff]
    %v330 = vld [vmem:[#allocation6 + $0x748] sm:$0xff]
    %v331 = vld [vmem:[#allocation6 + $0x750] sm:$0xff]
    %v332 = vld [vmem:[#allocation6 + $0x758] sm:$0xff]
    %v333 = vld [vmem:[#allocation6 + $0x760] sm:$0xff]
    %v334 = vld [vmem:[#allocation6 + $0x768] sm:$0xff]
    %v335 = vld [vmem:[#allocation6 + $0x770] sm:$0xff]
    %v336 = vld [vmem:[#allocation6 + $0x778] sm:$0xff]
    %v337 = vld [vmem:[#allocation6 + $0x780] sm:$0xff]
    %v338 = vld [vmem:[#allocation6 + $0x788] sm:$0xff]
    %v339 = vld [vmem:[#allocation6 + $0x790] sm:$0xff]
    %v340 = vld [vmem:[#allocation6 + $0x798] sm:$0xff]
    %v341 = vld [vmem:[#allocation6 + $0x7a0] sm:$0xff]
    %v342 = vld [vmem:[#allocation6 + $0x7a8] sm:$0xff]
    %v343 = vld [vmem:[#allocation6 + $0x7b0] sm:$0xff]
    %v344 = vld [vmem:[#allocation6 + $0x7b8] sm:$0xff]
    %v345 = vld [vmem:[#allocation6 + $0x7c0] sm:$0xff]
    %v346 = vld [vmem:[#allocation6 + $0x7c8] sm:$0xff]
    %v347 = vld [vmem:[#allocation6 + $0x7d0] sm:$0xff]
    %v348 = vld [vmem:[#allocation6 + $0x7d8] sm:$0xff]
    %v349 = vld [vmem:[#allocation6 + $0x7e0] sm:$0xff]
    %v350 = vld [vmem:[#allocation6 + $0x7e8] sm:$0xff]
    %v351 = vld [vmem:[#allocation6 + $0x7f0] sm:$0xff]
    %v352 = vld [vmem:[#allocation6 + $0x7f8] sm:$0xff]
    %v357 = vunpack.c.l.b16 %v93
    %v358 = vunpack.c.h.b16 %v93
    %v359 = vunpack.c.l.b16 %v94
    %v360 = vunpack.c.h.b16 %v94
    %v361 = vunpack.c.l.b16 %v95
    %v362 = vunpack.c.h.b16 %v95
    %v363 = vunpack.c.l.b16 %v96
    %v364 = vunpack.c.h.b16 %v96
    %v365 = vpack.c.b16 %v357, %v357
    %v366 = vpack.c.b16 %v358, %v358
    %v367 = vpack.c.b16 %v359, %v359
    %v368 = vpack.c.b16 %v360, %v360
    %v369 = vpack.c.b16 %v361, %v361
    %v370 = vpack.c.b16 %v362, %v362
    %v371 = vpack.c.b16 %v363, %v363
    %v372 = vpack.c.b16 %v364, %v364
    %v637 = vunpack.c.l.b16 %v97
    %v638 = vunpack.c.h.b16 %v97
    %v639 = vunpack.c.l.b16 %v98
    %v640 = vunpack.c.h.b16 %v98
    %v641 = vunpack.c.l.b16 %v99
    %v642 = vunpack.c.h.b16 %v99
    %v643 = vunpack.c.l.b16 %v100
    %v644 = vunpack.c.h.b16 %v100
    %v645 = vunpack.c.l.b16 %v101
    %v646 = vunpack.c.h.b16 %v101
    %v647 = vunpack.c.l.b16 %v102
    %v648 = vunpack.c.h.b16 %v102
    %v649 = vunpack.c.l.b16 %v103
    %v650 = vunpack.c.h.b16 %v103
    %v651 = vunpack.c.l.b16 %v104
    %v652 = vunpack.c.h.b16 %v104
    %v653 = vunpack.c.l.b16 %v105
    %v654 = vunpack.c.h.b16 %v105
    %v655 = vunpack.c.l.b16 %v106
    %v656 = vunpack.c.h.b16 %v106
    %v657 = vunpack.c.l.b16 %v107
    %v658 = vunpack.c.h.b16 %v107
    %v659 = vunpack.c.l.b16 %v108
    %v660 = vunpack.c.h.b16 %v108
    %v661 = vunpack.c.l.b16 %v109
    %v662 = vunpack.c.h.b16 %v109
    %v663 = vunpack.c.l.b16 %v110
    %v664 = vunpack.c.h.b16 %v110
    %v665 = vunpack.c.l.b16 %v111
    %v666 = vunpack.c.h.b16 %v111
    %v667 = vunpack.c.l.b16 %v112
    %v668 = vunpack.c.h.b16 %v112
    %v669 = vunpack.c.l.b16 %v113
    %v670 = vunpack.c.h.b16 %v113
    %v671 = vunpack.c.l.b16 %v114
    %v672 = vunpack.c.h.b16 %v114
    %v673 = vunpack.c.l.b16 %v115
    %v674 = vunpack.c.h.b16 %v115
    %v675 = vunpack.c.l.b16 %v116
    %v676 = vunpack.c.h.b16 %v116
    %v677 = vunpack.c.l.b16 %v117
    %v678 = vunpack.c.h.b16 %v117
    %v679 = vunpack.c.l.b16 %v118
    %v680 = vunpack.c.h.b16 %v118
    %v681 = vunpack.c.l.b16 %v119
    %v682 = vunpack.c.h.b16 %v119
    %v683 = vunpack.c.l.b16 %v120
    %v684 = vunpack.c.h.b16 %v120
    %v685 = vunpack.c.l.b16 %v121
    %v686 = vunpack.c.h.b16 %v121
    %v687 = vunpack.c.l.b16 %v122
    %v688 = vunpack.c.h.b16 %v122
    %v689 = vunpack.c.l.b16 %v123
    %v690 = vunpack.c.h.b16 %v123
    %v691 = vunpack.c.l.b16 %v124
    %v692 = vunpack.c.h.b16 %v124
    %v693 = vunpack.c.l.b16 %v125
    %v694 = vunpack.c.h.b16 %v125
    %v695 = vunpack.c.l.b16 %v126
    %v696 = vunpack.c.h.b16 %v126
    %v697 = vunpack.c.l.b16 %v127
    %v698 = vunpack.c.h.b16 %v127
    %v699 = vunpack.c.l.b16 %v128
    %v700 = vunpack.c.h.b16 %v128
    %v701 = vunpack.c.l.b16 %v129
    %v702 = vunpack.c.h.b16 %v129
    %v703 = vunpack.c.l.b16 %v130
    %v704 = vunpack.c.h.b16 %v130
    %v705 = vunpack.c.l.b16 %v131
    %v706 = vunpack.c.h.b16 %v131
    %v707 = vunpack.c.l.b16 %v132
    %v708 = vunpack.c.h.b16 %v132
    %v709 = vunpack.c.l.b16 %v133
    %v710 = vunpack.c.h.b16 %v133
    %v711 = vunpack.c.l.b16 %v134
    %v712 = vunpack.c.h.b16 %v134
    %v713 = vunpack.c.l.b16 %v135
    %v714 = vunpack.c.h.b16 %v135
    %v715 = vunpack.c.l.b16 %v136
    %v716 = vunpack.c.h.b16 %v136
    %v717 = vunpack.c.l.b16 %v137
    %v718 = vunpack.c.h.b16 %v137
    %v719 = vunpack.c.l.b16 %v138
    %v720 = vunpack.c.h.b16 %v138
    %v721 = vunpack.c.l.b16 %v139
    %v722 = vunpack.c.h.b16 %v139
    %v723 = vunpack.c.l.b16 %v140
    %v724 = vunpack.c.h.b16 %v140
    %v725 = vunpack.c.l.b16 %v141
    %v726 = vunpack.c.h.b16 %v141
    %v727 = vunpack.c.l.b16 %v142
    %v728 = vunpack.c.h.b16 %v142
    %v729 = vunpack.c.l.b16 %v143
    %v730 = vunpack.c.h.b16 %v143
    %v731 = vunpack.c.l.b16 %v144
    %v732 = vunpack.c.h.b16 %v144
    %v733 = vunpack.c.l.b16 %v145
    %v734 = vunpack.c.h.b16 %v145
    %v735 = vunpack.c.l.b16 %v146
    %v736 = vunpack.c.h.b16 %v146
    %v737 = vunpack.c.l.b16 %v147
    %v738 = vunpack.c.h.b16 %v147
    %v739 = vunpack.c.l.b16 %v148
    %v740 = vunpack.c.h.b16 %v148
    %v741 = vunpack.c.l.b16 %v149
    %v742 = vunpack.c.h.b16 %v149
    %v743 = vunpack.c.l.b16 %v150
    %v744 = vunpack.c.h.b16 %v150
    %v745 = vunpack.c.l.b16 %v151
    %v746 = vunpack.c.h.b16 %v151
    %v747 = vunpack.c.l.b16 %v152
    %v748 = vunpack.c.h.b16 %v152
    %v749 = vunpack.c.l.b16 %v153
    %v750 = vunpack.c.h.b16 %v153
    %v751 = vunpack.c.l.b16 %v154
    %v752 = vunpack.c.h.b16 %v154
    %v753 = vunpack.c.l.b16 %v155
    %v754 = vunpack.c.h.b16 %v155
    %v755 = vunpack.c.l.b16 %v156
    %v756 = vunpack.c.h.b16 %v156
    %v757 = vunpack.c.l.b16 %v157
    %v758 = vunpack.c.h.b16 %v157
    %v759 = vunpack.c.l.b16 %v158
    %v760 = vunpack.c.h.b16 %v158
    %v761 = vunpack.c.l.b16 %v159
    %v762 = vunpack.c.h.b16 %v159
    %v763 = vunpack.c.l.b16 %v160
    %v764 = vunpack.c.h.b16 %v160
    %v765 = vunpack.c.l.b16 %v161
    %v766 = vunpack.c.h.b16 %v161
    %v767 = vunpack.c.l.b16 %v162
    %v768 = vunpack.c.h.b16 %v162
    %v769 = vunpack.c.l.b16 %v163
    %v770 = vunpack.c.h.b16 %v163
    %v771 = vunpack.c.l.b16 %v164
    %v772 = vunpack.c.h.b16 %v164
    %v773 = vunpack.c.l.b16 %v165
    %v774 = vunpack.c.h.b16 %v165
    %v775 = vunpack.c.l.b16 %v166
    %v776 = vunpack.c.h.b16 %v166
    %v777 = vunpack.c.l.b16 %v167
    %v778 = vunpack.c.h.b16 %v167
    %v779 = vunpack.c.l.b16 %v168
    %v780 = vunpack.c.h.b16 %v168
    %v781 = vunpack.c.l.b16 %v169
    %v782 = vunpack.c.h.b16 %v169
    %v783 = vunpack.c.l.b16 %v170
    %v784 = vunpack.c.h.b16 %v170
    %v785 = vunpack.c.l.b16 %v171
    %v786 = vunpack.c.h.b16 %v171
    %v787 = vunpack.c.l.b16 %v172
    %v788 = vunpack.c.h.b16 %v172
    %v789 = vunpack.c.l.b16 %v173
    %v790 = vunpack.c.h.b16 %v173
    %v791 = vunpack.c.l.b16 %v174
    %v792 = vunpack.c.h.b16 %v174
    %v793 = vunpack.c.l.b16 %v175
    %v794 = vunpack.c.h.b16 %v175
    %v795 = vunpack.c.l.b16 %v176
    %v796 = vunpack.c.h.b16 %v176
    %v797 = vunpack.c.l.b16 %v177
    %v798 = vunpack.c.h.b16 %v177
    %v799 = vunpack.c.l.b16 %v178
    %v800 = vunpack.c.h.b16 %v178
    %v801 = vunpack.c.l.b16 %v179
    %v802 = vunpack.c.h.b16 %v179
    %v803 = vunpack.c.l.b16 %v180
    %v804 = vunpack.c.h.b16 %v180
    %v805 = vunpack.c.l.b16 %v181
    %v806 = vunpack.c.h.b16 %v181
    %v807 = vunpack.c.l.b16 %v182
    %v808 = vunpack.c.h.b16 %v182
    %v809 = vunpack.c.l.b16 %v183
    %v810 = vunpack.c.h.b16 %v183
    %v811 = vunpack.c.l.b16 %v184
    %v812 = vunpack.c.h.b16 %v184
    %v813 = vunpack.c.l.b16 %v185
    %v814 = vunpack.c.h.b16 %v185
    %v815 = vunpack.c.l.b16 %v186
    %v816 = vunpack.c.h.b16 %v186
    %v817 = vunpack.c.l.b16 %v187
    %v818 = vunpack.c.h.b16 %v187
    %v819 = vunpack.c.l.b16 %v188
    %v820 = vunpack.c.h.b16 %v188
    %v821 = vunpack.c.l.b16 %v189
    %v822 = vunpack.c.h.b16 %v189
    %v823 = vunpack.c.l.b16 %v190
    %v824 = vunpack.c.h.b16 %v190
    %v825 = vunpack.c.l.b16 %v191
    %v826 = vunpack.c.h.b16 %v191
    %v827 = vunpack.c.l.b16 %v192
    %v828 = vunpack.c.h.b16 %v192
    %v829 = vunpack.c.l.b16 %v193
    %v830 = vunpack.c.h.b16 %v193
    %v831 = vunpack.c.l.b16 %v194
    %v832 = vunpack.c.h.b16 %v194
    %v833 = vunpack.c.l.b16 %v195
    %v834 = vunpack.c.h.b16 %v195
    %v835 = vunpack.c.l.b16 %v196
    %v836 = vunpack.c.h.b16 %v196
    %v837 = vunpack.c.l.b16 %v197
    %v838 = vunpack.c.h.b16 %v197
    %v839 = vunpack.c.l.b16 %v198
    %v840 = vunpack.c.h.b16 %v198
    %v841 = vunpack.c.l.b16 %v199
    %v842 = vunpack.c.h.b16 %v199
    %v843 = vunpack.c.l.b16 %v200
    %v844 = vunpack.c.h.b16 %v200
    %v845 = vunpack.c.l.b16 %v201
    %v846 = vunpack.c.h.b16 %v201
    %v847 = vunpack.c.l.b16 %v202
    %v848 = vunpack.c.h.b16 %v202
    %v849 = vunpack.c.l.b16 %v203
    %v850 = vunpack.c.h.b16 %v203
    %v851 = vunpack.c.l.b16 %v204
    %v852 = vunpack.c.h.b16 %v204
    %v853 = vunpack.c.l.b16 %v205
    %v854 = vunpack.c.h.b16 %v205
    %v855 = vunpack.c.l.b16 %v206
    %v856 = vunpack.c.h.b16 %v206
    %v857 = vunpack.c.l.b16 %v207
    %v858 = vunpack.c.h.b16 %v207
    %v859 = vunpack.c.l.b16 %v208
    %v860 = vunpack.c.h.b16 %v208
    %v861 = vunpack.c.l.b16 %v209
    %v862 = vunpack.c.h.b16 %v209
    %v863 = vunpack.c.l.b16 %v210
    %v864 = vunpack.c.h.b16 %v210
    %v865 = vunpack.c.l.b16 %v211
    %v866 = vunpack.c.h.b16 %v211
    %v867 = vunpack.c.l.b16 %v212
    %v868 = vunpack.c.h.b16 %v212
    %v869 = vunpack.c.l.b16 %v213
    %v870 = vunpack.c.h.b16 %v213
    %v871 = vunpack.c.l.b16 %v214
    %v872 = vunpack.c.h.b16 %v214
    %v873 = vunpack.c.l.b16 %v215
    %v874 = vunpack.c.h.b16 %v215
    %v875 = vunpack.c.l.b16 %v216
    %v876 = vunpack.c.h.b16 %v216
    %v877 = vunpack.c.l.b16 %v217
    %v878 = vunpack.c.h.b16 %v217
    %v879 = vunpack.c.l.b16 %v218
    %v880 = vunpack.c.h.b16 %v218
    %v881 = vunpack.c.l.b16 %v219
    %v882 = vunpack.c.h.b16 %v219
    %v883 = vunpack.c.l.b16 %v220
    %v884 = vunpack.c.h.b16 %v220
    %v885 = vunpack.c.l.b16 %v221
    %v886 = vunpack.c.h.b16 %v221
    %v887 = vunpack.c.l.b16 %v222
    %v888 = vunpack.c.h.b16 %v222
    %v889 = vunpack.c.l.b16 %v223
    %v890 = vunpack.c.h.b16 %v223
    %v891 = vunpack.c.l.b16 %v224
    %v892 = vunpack.c.h.b16 %v224
    %v893 = vunpack.c.l.b16 %v225
    %v894 = vunpack.c.h.b16 %v225
    %v895 = vunpack.c.l.b16 %v226
    %v896 = vunpack.c.h.b16 %v226
    %v897 = vunpack.c.l.b16 %v227
    %v898 = vunpack.c.h.b16 %v227
    %v899 = vunpack.c.l.b16 %v228
    %v900 = vunpack.c.h.b16 %v228
    %v901 = vunpack.c.l.b16 %v229
    %v902 = vunpack.c.h.b16 %v229
    %v903 = vunpack.c.l.b16 %v230
    %v904 = vunpack.c.h.b16 %v230
    %v905 = vunpack.c.l.b16 %v231
    %v906 = vunpack.c.h.b16 %v231
    %v907 = vunpack.c.l.b16 %v232
    %v908 = vunpack.c.h.b16 %v232
    %v909 = vunpack.c.l.b16 %v233
    %v910 = vunpack.c.h.b16 %v233
    %v911 = vunpack.c.l.b16 %v234
    %v912 = vunpack.c.h.b16 %v234
    %v913 = vunpack.c.l.b16 %v235
    %v914 = vunpack.c.h.b16 %v235
    %v915 = vunpack.c.l.b16 %v236
    %v916 = vunpack.c.h.b16 %v236
    %v917 = vunpack.c.l.b16 %v237
    %v918 = vunpack.c.h.b16 %v237
    %v919 = vunpack.c.l.b16 %v238
    %v920 = vunpack.c.h.b16 %v238
    %v921 = vunpack.c.l.b16 %v239
    %v922 = vunpack.c.h.b16 %v239
    %v923 = vunpack.c.l.b16 %v240
    %v924 = vunpack.c.h.b16 %v240
    %v925 = vunpack.c.l.b16 %v241
    %v926 = vunpack.c.h.b16 %v241
    %v927 = vunpack.c.l.b16 %v242
    %v928 = vunpack.c.h.b16 %v242
    %v929 = vunpack.c.l.b16 %v243
    %v930 = vunpack.c.h.b16 %v243
    %v931 = vunpack.c.l.b16 %v244
    %v932 = vunpack.c.h.b16 %v244
    %v933 = vunpack.c.l.b16 %v245
    %v934 = vunpack.c.h.b16 %v245
    %v935 = vunpack.c.l.b16 %v246
    %v936 = vunpack.c.h.b16 %v246
    %v937 = vunpack.c.l.b16 %v247
    %v938 = vunpack.c.h.b16 %v247
    %v939 = vunpack.c.l.b16 %v248
    %v940 = vunpack.c.h.b16 %v248
    %v941 = vunpack.c.l.b16 %v249
    %v942 = vunpack.c.h.b16 %v249
    %v943 = vunpack.c.l.b16 %v250
    %v944 = vunpack.c.h.b16 %v250
    %v945 = vunpack.c.l.b16 %v251
    %v946 = vunpack.c.h.b16 %v251
    %v947 = vunpack.c.l.b16 %v252
    %v948 = vunpack.c.h.b16 %v252
    %v949 = vunpack.c.l.b16 %v253
    %v950 = vunpack.c.h.b16 %v253
    %v951 = vunpack.c.l.b16 %v254
    %v952 = vunpack.c.h.b16 %v254
    %v953 = vunpack.c.l.b16 %v255
    %v954 = vunpack.c.h.b16 %v255
    %v955 = vunpack.c.l.b16 %v256
    %v956 = vunpack.c.h.b16 %v256
    %v957 = vunpack.c.l.b16 %v257
    %v958 = vunpack.c.h.b16 %v257
    %v959 = vunpack.c.l.b16 %v258
    %v960 = vunpack.c.h.b16 %v258
    %v961 = vunpack.c.l.b16 %v259
    %v962 = vunpack.c.h.b16 %v259
    %v963 = vunpack.c.l.b16 %v260
    %v964 = vunpack.c.h.b16 %v260
    %v965 = vunpack.c.l.b16 %v261
    %v966 = vunpack.c.h.b16 %v261
    %v967 = vunpack.c.l.b16 %v262
    %v968 = vunpack.c.h.b16 %v262
    %v969 = vunpack.c.l.b16 %v263
    %v970 = vunpack.c.h.b16 %v263
    %v971 = vunpack.c.l.b16 %v264
    %v972 = vunpack.c.h.b16 %v264
    %v973 = vunpack.c.l.b16 %v265
    %v974 = vunpack.c.h.b16 %v265
    %v975 = vunpack.c.l.b16 %v266
    %v976 = vunpack.c.h.b16 %v266
    %v977 = vunpack.c.l.b16 %v267
    %v978 = vunpack.c.h.b16 %v267
    %v979 = vunpack.c.l.b16 %v268
    %v980 = vunpack.c.h.b16 %v268
    %v981 = vunpack.c.l.b16 %v269
    %v982 = vunpack.c.h.b16 %v269
    %v983 = vunpack.c.l.b16 %v270
    %v984 = vunpack.c.h.b16 %v270
    %v985 = vunpack.c.l.b16 %v271
    %v986 = vunpack.c.h.b16 %v271
    %v987 = vunpack.c.l.b16 %v272
    %v988 = vunpack.c.h.b16 %v272
    %v989 = vunpack.c.l.b16 %v273
    %v990 = vunpack.c.h.b16 %v273
    %v991 = vunpack.c.l.b16 %v274
    %v992 = vunpack.c.h.b16 %v274
    %v993 = vunpack.c.l.b16 %v275
    %v994 = vunpack.c.h.b16 %v275
    %v995 = vunpack.c.l.b16 %v276
    %v996 = vunpack.c.h.b16 %v276
    %v997 = vunpack.c.l.b16 %v277
    %v998 = vunpack.c.h.b16 %v277
    %v999 = vunpack.c.l.b16 %v278
    %v1000 = vunpack.c.h.b16 %v278
    %v1001 = vunpack.c.l.b16 %v279
    %v1002 = vunpack.c.h.b16 %v279
    %v1003 = vunpack.c.l.b16 %v280
    %v1004 = vunpack.c.h.b16 %v280
    %v1005 = vunpack.c.l.b16 %v281
    %v1006 = vunpack.c.h.b16 %v281
    %v1007 = vunpack.c.l.b16 %v282
    %v1008 = vunpack.c.h.b16 %v282
    %v1009 = vunpack.c.l.b16 %v283
    %v1010 = vunpack.c.h.b16 %v283
    %v1011 = vunpack.c.l.b16 %v284
    %v1012 = vunpack.c.h.b16 %v284
    %v1013 = vunpack.c.l.b16 %v285
    %v1014 = vunpack.c.h.b16 %v285
    %v1015 = vunpack.c.l.b16 %v286
    %v1016 = vunpack.c.h.b16 %v286
    %v1017 = vunpack.c.l.b16 %v287
    %v1018 = vunpack.c.h.b16 %v287
    %v1019 = vunpack.c.l.b16 %v288
    %v1020 = vunpack.c.h.b16 %v288
    %v1021 = vunpack.c.l.b16 %v289
    %v1022 = vunpack.c.h.b16 %v289
    %v1023 = vunpack.c.l.b16 %v290
    %v1024 = vunpack.c.h.b16 %v290
    %v1025 = vunpack.c.l.b16 %v291
    %v1026 = vunpack.c.h.b16 %v291
    %v1027 = vunpack.c.l.b16 %v292
    %v1028 = vunpack.c.h.b16 %v292
    %v1029 = vunpack.c.l.b16 %v293
    %v1030 = vunpack.c.h.b16 %v293
    %v1031 = vunpack.c.l.b16 %v294
    %v1032 = vunpack.c.h.b16 %v294
    %v1033 = vunpack.c.l.b16 %v295
    %v1034 = vunpack.c.h.b16 %v295
    %v1035 = vunpack.c.l.b16 %v296
    %v1036 = vunpack.c.h.b16 %v296
    %v1037 = vunpack.c.l.b16 %v297
    %v1038 = vunpack.c.h.b16 %v297
    %v1039 = vunpack.c.l.b16 %v298
    %v1040 = vunpack.c.h.b16 %v298
    %v1041 = vunpack.c.l.b16 %v299
    %v1042 = vunpack.c.h.b16 %v299
    %v1043 = vunpack.c.l.b16 %v300
    %v1044 = vunpack.c.h.b16 %v300
    %v1045 = vunpack.c.l.b16 %v301
    %v1046 = vunpack.c.h.b16 %v301
    %v1047 = vunpack.c.l.b16 %v302
    %v1048 = vunpack.c.h.b16 %v302
    %v1049 = vunpack.c.l.b16 %v303
    %v1050 = vunpack.c.h.b16 %v303
    %v1051 = vunpack.c.l.b16 %v304
    %v1052 = vunpack.c.h.b16 %v304
    %v1053 = vunpack.c.l.b16 %v305
    %v1054 = vunpack.c.h.b16 %v305
    %v1055 = vunpack.c.l.b16 %v306
    %v1056 = vunpack.c.h.b16 %v306
    %v1057 = vunpack.c.l.b16 %v307
    %v1058 = vunpack.c.h.b16 %v307
    %v1059 = vunpack.c.l.b16 %v308
    %v1060 = vunpack.c.h.b16 %v308
    %v1061 = vunpack.c.l.b16 %v309
    %v1062 = vunpack.c.h.b16 %v309
    %v1063 = vunpack.c.l.b16 %v310
    %v1064 = vunpack.c.h.b16 %v310
    %v1065 = vunpack.c.l.b16 %v311
    %v1066 = vunpack.c.h.b16 %v311
    %v1067 = vunpack.c.l.b16 %v312
    %v1068 = vunpack.c.h.b16 %v312
    %v1069 = vunpack.c.l.b16 %v313
    %v1070 = vunpack.c.h.b16 %v313
    %v1071 = vunpack.c.l.b16 %v314
    %v1072 = vunpack.c.h.b16 %v314
    %v1073 = vunpack.c.l.b16 %v315
    %v1074 = vunpack.c.h.b16 %v315
    %v1075 = vunpack.c.l.b16 %v316
    %v1076 = vunpack.c.h.b16 %v316
    %v1077 = vunpack.c.l.b16 %v317
    %v1078 = vunpack.c.h.b16 %v317
    %v1079 = vunpack.c.l.b16 %v318
    %v1080 = vunpack.c.h.b16 %v318
    %v1081 = vunpack.c.l.b16 %v319
    %v1082 = vunpack.c.h.b16 %v319
    %v1083 = vunpack.c.l.b16 %v320
    %v1084 = vunpack.c.h.b16 %v320
    %v1085 = vunpack.c.l.b16 %v321
    %v1086 = vunpack.c.h.b16 %v321
    %v1087 = vunpack.c.l.b16 %v322
    %v1088 = vunpack.c.h.b16 %v322
    %v1089 = vunpack.c.l.b16 %v323
    %v1090 = vunpack.c.h.b16 %v323
    %v1091 = vunpack.c.l.b16 %v324
    %v1092 = vunpack.c.h.b16 %v324
    %v1093 = vunpack.c.l.b16 %v325
    %v1094 = vunpack.c.h.b16 %v325
    %v1095 = vunpack.c.l.b16 %v326
    %v1096 = vunpack.c.h.b16 %v326
    %v1097 = vunpack.c.l.b16 %v327
    %v1098 = vunpack.c.h.b16 %v327
    %v1099 = vunpack.c.l.b16 %v328
    %v1100 = vunpack.c.h.b16 %v328
    %v1101 = vunpack.c.l.b16 %v329
    %v1102 = vunpack.c.h.b16 %v329
    %v1103 = vunpack.c.l.b16 %v330
    %v1104 = vunpack.c.h.b16 %v330
    %v1105 = vunpack.c.l.b16 %v331
    %v1106 = vunpack.c.h.b16 %v331
    %v1107 = vunpack.c.l.b16 %v332
    %v1108 = vunpack.c.h.b16 %v332
    %v1109 = vunpack.c.l.b16 %v333
    %v1110 = vunpack.c.h.b16 %v333
    %v1111 = vunpack.c.l.b16 %v334
    %v1112 = vunpack.c.h.b16 %v334
    %v1113 = vunpack.c.l.b16 %v335
    %v1114 = vunpack.c.h.b16 %v335
    %v1115 = vunpack.c.l.b16 %v336
    %v1116 = vunpack.c.h.b16 %v336
    %v1117 = vunpack.c.l.b16 %v337
    %v1118 = vunpack.c.h.b16 %v337
    %v1119 = vunpack.c.l.b16 %v338
    %v1120 = vunpack.c.h.b16 %v338
    %v1121 = vunpack.c.l.b16 %v339
    %v1122 = vunpack.c.h.b16 %v339
    %v1123 = vunpack.c.l.b16 %v340
    %v1124 = vunpack.c.h.b16 %v340
    %v1125 = vunpack.c.l.b16 %v341
    %v1126 = vunpack.c.h.b16 %v341
    %v1127 = vunpack.c.l.b16 %v342
    %v1128 = vunpack.c.h.b16 %v342
    %v1129 = vunpack.c.l.b16 %v343
    %v1130 = vunpack.c.h.b16 %v343
    %v1131 = vunpack.c.l.b16 %v344
    %v1132 = vunpack.c.h.b16 %v344
    %v1133 = vunpack.c.l.b16 %v345
    %v1134 = vunpack.c.h.b16 %v345
    %v1135 = vunpack.c.l.b16 %v346
    %v1136 = vunpack.c.h.b16 %v346
    %v1137 = vunpack.c.l.b16 %v347
    %v1138 = vunpack.c.h.b16 %v347
    %v1139 = vunpack.c.l.b16 %v348
    %v1140 = vunpack.c.h.b16 %v348
    %v1141 = vunpack.c.l.b16 %v349
    %v1142 = vunpack.c.h.b16 %v349
    %v1143 = vunpack.c.l.b16 %v350
    %v1144 = vunpack.c.h.b16 %v350
    %v1145 = vunpack.c.l.b16 %v351
    %v1146 = vunpack.c.h.b16 %v351
    %v1147 = vunpack.c.l.b16 %v352
    %v1148 = vunpack.c.h.b16 %v352
    %v1149 = vpack.c.b16 %v641, %v637
    %v1150 = vpack.c.b16 %v642, %v638
    %v1151 = vpack.c.b16 %v643, %v639
    %v1152 = vpack.c.b16 %v644, %v640
    %v1153 = vpack.c.b16 %v649, %v645
    %v1154 = vpack.c.b16 %v650, %v646
    %v1155 = vpack.c.b16 %v651, %v647
    %v1156 = vpack.c.b16 %v652, %v648
    %v1157 = vpack.c.b16 %v657, %v653
    %v1158 = vpack.c.b16 %v658, %v654
    %v1159 = vpack.c.b16 %v659, %v655
    %v1160 = vpack.c.b16 %v660, %v656
    %v1161 = vpack.c.b16 %v665, %v661
    %v1162 = vpack.c.b16 %v666, %v662
    %v1163 = vpack.c.b16 %v667, %v663
    %v1164 = vpack.c.b16 %v668, %v664
    %v1165 = vpack.c.b16 %v673, %v669
    %v1166 = vpack.c.b16 %v674, %v670
    %v1167 = vpack.c.b16 %v675, %v671
    %v1168 = vpack.c.b16 %v676, %v672
    %v1169 = vpack.c.b16 %v681, %v677
    %v1170 = vpack.c.b16 %v682, %v678
    %v1171 = vpack.c.b16 %v683, %v679
    %v1172 = vpack.c.b16 %v684, %v680
    %v1173 = vpack.c.b16 %v689, %v685
    %v1174 = vpack.c.b16 %v690, %v686
    %v1175 = vpack.c.b16 %v691, %v687
    %v1176 = vpack.c.b16 %v692, %v688
    %v1177 = vpack.c.b16 %v697, %v693
    %v1178 = vpack.c.b16 %v698, %v694
    %v1179 = vpack.c.b16 %v699, %v695
    %v1180 = vpack.c.b16 %v700, %v696
    %v1181 = vpack.c.b16 %v705, %v701
    %v1182 = vpack.c.b16 %v706, %v702
    %v1183 = vpack.c.b16 %v707, %v703
    %v1184 = vpack.c.b16 %v708, %v704
    %v1185 = vpack.c.b16 %v713, %v709
    %v1186 = vpack.c.b16 %v714, %v710
    %v1187 = vpack.c.b16 %v715, %v711
    %v1188 = vpack.c.b16 %v716, %v712
    %v1189 = vpack.c.b16 %v721, %v717
    %v1190 = vpack.c.b16 %v722, %v718
    %v1191 = vpack.c.b16 %v723, %v719
    %v1192 = vpack.c.b16 %v724, %v720
    %v1193 = vpack.c.b16 %v729, %v725
    %v1194 = vpack.c.b16 %v730, %v726
    %v1195 = vpack.c.b16 %v731, %v727
    %v1196 = vpack.c.b16 %v732, %v728
    %v1197 = vpack.c.b16 %v737, %v733
    %v1198 = vpack.c.b16 %v738, %v734
    %v1199 = vpack.c.b16 %v739, %v735
    %v1200 = vpack.c.b16 %v740, %v736
    %v1201 = vpack.c.b16 %v745, %v741
    %v1202 = vpack.c.b16 %v746, %v742
    %v1203 = vpack.c.b16 %v747, %v743
    %v1204 = vpack.c.b16 %v748, %v744
    %v1205 = vpack.c.b16 %v753, %v749
    %v1206 = vpack.c.b16 %v754, %v750
    %v1207 = vpack.c.b16 %v755, %v751
    %v1208 = vpack.c.b16 %v756, %v752
    %v1209 = vpack.c.b16 %v761, %v757
    %v1210 = vpack.c.b16 %v762, %v758
    %v1211 = vpack.c.b16 %v763, %v759
    %v1212 = vpack.c.b16 %v764, %v760
    %v1213 = vpack.c.b16 %v769, %v765
    %v1214 = vpack.c.b16 %v770, %v766
    %v1215 = vpack.c.b16 %v771, %v767
    %v1216 = vpack.c.b16 %v772, %v768
    %v1217 = vpack.c.b16 %v777, %v773
    %v1218 = vpack.c.b16 %v778, %v774
    %v1219 = vpack.c.b16 %v779, %v775
    %v1220 = vpack.c.b16 %v780, %v776
    %v1221 = vpack.c.b16 %v785, %v781
    %v1222 = vpack.c.b16 %v786, %v782
    %v1223 = vpack.c.b16 %v787, %v783
    %v1224 = vpack.c.b16 %v788, %v784
    %v1225 = vpack.c.b16 %v793, %v789
    %v1226 = vpack.c.b16 %v794, %v790
    %v1227 = vpack.c.b16 %v795, %v791
    %v1228 = vpack.c.b16 %v796, %v792
    %v1229 = vpack.c.b16 %v801, %v797
    %v1230 = vpack.c.b16 %v802, %v798
    %v1231 = vpack.c.b16 %v803, %v799
    %v1232 = vpack.c.b16 %v804, %v800
    %v1233 = vpack.c.b16 %v809, %v805
    %v1234 = vpack.c.b16 %v810, %v806
    %v1235 = vpack.c.b16 %v811, %v807
    %v1236 = vpack.c.b16 %v812, %v808
    %v1237 = vpack.c.b16 %v817, %v813
    %v1238 = vpack.c.b16 %v818, %v814
    %v1239 = vpack.c.b16 %v819, %v815
    %v1240 = vpack.c.b16 %v820, %v816
    %v1241 = vpack.c.b16 %v825, %v821
    %v1242 = vpack.c.b16 %v826, %v822
    %v1243 = vpack.c.b16 %v827, %v823
    %v1244 = vpack.c.b16 %v828, %v824
    %v1245 = vpack.c.b16 %v833, %v829
    %v1246 = vpack.c.b16 %v834, %v830
    %v1247 = vpack.c.b16 %v835, %v831
    %v1248 = vpack.c.b16 %v836, %v832
    %v1249 = vpack.c.b16 %v841, %v837
    %v1250 = vpack.c.b16 %v842, %v838
    %v1251 = vpack.c.b16 %v843, %v839
    %v1252 = vpack.c.b16 %v844, %v840
    %v1253 = vpack.c.b16 %v849, %v845
    %v1254 = vpack.c.b16 %v850, %v846
    %v1255 = vpack.c.b16 %v851, %v847
    %v1256 = vpack.c.b16 %v852, %v848
    %v1257 = vpack.c.b16 %v857, %v853
    %v1258 = vpack.c.b16 %v858, %v854
    %v1259 = vpack.c.b16 %v859, %v855
    %v1260 = vpack.c.b16 %v860, %v856
    %v1261 = vpack.c.b16 %v865, %v861
    %v1262 = vpack.c.b16 %v866, %v862
    %v1263 = vpack.c.b16 %v867, %v863
    %v1264 = vpack.c.b16 %v868, %v864
    %v1265 = vpack.c.b16 %v873, %v869
    %v1266 = vpack.c.b16 %v874, %v870
    %v1267 = vpack.c.b16 %v875, %v871
    %v1268 = vpack.c.b16 %v876, %v872
    %v1269 = vpack.c.b16 %v881, %v877
    %v1270 = vpack.c.b16 %v882, %v878
    %v1271 = vpack.c.b16 %v883, %v879
    %v1272 = vpack.c.b16 %v884, %v880
    %v1273 = vpack.c.b16 %v889, %v885
    %v1274 = vpack.c.b16 %v890, %v886
    %v1275 = vpack.c.b16 %v891, %v887
    %v1276 = vpack.c.b16 %v892, %v888
    %v1277 = vpack.c.b16 %v897, %v893
    %v1278 = vpack.c.b16 %v898, %v894
    %v1279 = vpack.c.b16 %v899, %v895
    %v1280 = vpack.c.b16 %v900, %v896
    %v1281 = vpack.c.b16 %v905, %v901
    %v1282 = vpack.c.b16 %v906, %v902
    %v1283 = vpack.c.b16 %v907, %v903
    %v1284 = vpack.c.b16 %v908, %v904
    %v1285 = vpack.c.b16 %v913, %v909
    %v1286 = vpack.c.b16 %v914, %v910
    %v1287 = vpack.c.b16 %v915, %v911
    %v1288 = vpack.c.b16 %v916, %v912
    %v1289 = vpack.c.b16 %v921, %v917
    %v1290 = vpack.c.b16 %v922, %v918
    %v1291 = vpack.c.b16 %v923, %v919
    %v1292 = vpack.c.b16 %v924, %v920
    %v1293 = vpack.c.b16 %v929, %v925
    %v1294 = vpack.c.b16 %v930, %v926
    %v1295 = vpack.c.b16 %v931, %v927
    %v1296 = vpack.c.b16 %v932, %v928
    %v1297 = vpack.c.b16 %v937, %v933
    %v1298 = vpack.c.b16 %v938, %v934
    %v1299 = vpack.c.b16 %v939, %v935
    %v1300 = vpack.c.b16 %v940, %v936
    %v1301 = vpack.c.b16 %v945, %v941
    %v1302 = vpack.c.b16 %v946, %v942
    %v1303 = vpack.c.b16 %v947, %v943
    %v1304 = vpack.c.b16 %v948, %v944
    %v1305 = vpack.c.b16 %v953, %v949
    %v1306 = vpack.c.b16 %v954, %v950
    %v1307 = vpack.c.b16 %v955, %v951
    %v1308 = vpack.c.b16 %v956, %v952
    %v1309 = vpack.c.b16 %v961, %v957
    %v1310 = vpack.c.b16 %v962, %v958
    %v1311 = vpack.c.b16 %v963, %v959
    %v1312 = vpack.c.b16 %v964, %v960
    %v1313 = vpack.c.b16 %v969, %v965
    %v1314 = vpack.c.b16 %v970, %v966
    %v1315 = vpack.c.b16 %v971, %v967
    %v1316 = vpack.c.b16 %v972, %v968
    %v1317 = vpack.c.b16 %v977, %v973
    %v1318 = vpack.c.b16 %v978, %v974
    %v1319 = vpack.c.b16 %v979, %v975
    %v1320 = vpack.c.b16 %v980, %v976
    %v1321 = vpack.c.b16 %v985, %v981
    %v1322 = vpack.c.b16 %v986, %v982
    %v1323 = vpack.c.b16 %v987, %v983
    %v1324 = vpack.c.b16 %v988, %v984
    %v1325 = vpack.c.b16 %v993, %v989
    %v1326 = vpack.c.b16 %v994, %v990
    %v1327 = vpack.c.b16 %v995, %v991
    %v1328 = vpack.c.b16 %v996, %v992
    %v1329 = vpack.c.b16 %v1001, %v997
    %v1330 = vpack.c.b16 %v1002, %v998
    %v1331 = vpack.c.b16 %v1003, %v999
    %v1332 = vpack.c.b16 %v1004, %v1000
    %v1333 = vpack.c.b16 %v1009, %v1005
    %v1334 = vpack.c.b16 %v1010, %v1006
    %v1335 = vpack.c.b16 %v1011, %v1007
    %v1336 = vpack.c.b16 %v1012, %v1008
    %v1337 = vpack.c.b16 %v1017, %v1013
    %v1338 = vpack.c.b16 %v1018, %v1014
    %v1339 = vpack.c.b16 %v1019, %v1015
    %v1340 = vpack.c.b16 %v1020, %v1016
    %v1341 = vpack.c.b16 %v1025, %v1021
    %v1342 = vpack.c.b16 %v1026, %v1022
    %v1343 = vpack.c.b16 %v1027, %v1023
    %v1344 = vpack.c.b16 %v1028, %v1024
    %v1345 = vpack.c.b16 %v1033, %v1029
    %v1346 = vpack.c.b16 %v1034, %v1030
    %v1347 = vpack.c.b16 %v1035, %v1031
    %v1348 = vpack.c.b16 %v1036, %v1032
    %v1349 = vpack.c.b16 %v1041, %v1037
    %v1350 = vpack.c.b16 %v1042, %v1038
    %v1351 = vpack.c.b16 %v1043, %v1039
    %v1352 = vpack.c.b16 %v1044, %v1040
    %v1353 = vpack.c.b16 %v1049, %v1045
    %v1354 = vpack.c.b16 %v1050, %v1046
    %v1355 = vpack.c.b16 %v1051, %v1047
    %v1356 = vpack.c.b16 %v1052, %v1048
    %v1357 = vpack.c.b16 %v1057, %v1053
    %v1358 = vpack.c.b16 %v1058, %v1054
    %v1359 = vpack.c.b16 %v1059, %v1055
    %v1360 = vpack.c.b16 %v1060, %v1056
    %v1361 = vpack.c.b16 %v1065, %v1061
    %v1362 = vpack.c.b16 %v1066, %v1062
    %v1363 = vpack.c.b16 %v1067, %v1063
    %v1364 = vpack.c.b16 %v1068, %v1064
    %v1365 = vpack.c.b16 %v1073, %v1069
    %v1366 = vpack.c.b16 %v1074, %v1070
    %v1367 = vpack.c.b16 %v1075, %v1071
    %v1368 = vpack.c.b16 %v1076, %v1072
    %v1369 = vpack.c.b16 %v1081, %v1077
    %v1370 = vpack.c.b16 %v1082, %v1078
    %v1371 = vpack.c.b16 %v1083, %v1079
    %v1372 = vpack.c.b16 %v1084, %v1080
    %v1373 = vpack.c.b16 %v1089, %v1085
    %v1374 = vpack.c.b16 %v1090, %v1086
    %v1375 = vpack.c.b16 %v1091, %v1087
    %v1376 = vpack.c.b16 %v1092, %v1088
    %v1377 = vpack.c.b16 %v1097, %v1093
    %v1378 = vpack.c.b16 %v1098, %v1094
    %v1379 = vpack.c.b16 %v1099, %v1095
    %v1380 = vpack.c.b16 %v1100, %v1096
    %v1381 = vpack.c.b16 %v1105, %v1101
    %v1382 = vpack.c.b16 %v1106, %v1102
    %v1383 = vpack.c.b16 %v1107, %v1103
    %v1384 = vpack.c.b16 %v1108, %v1104
    %v1385 = vpack.c.b16 %v1113, %v1109
    %v1386 = vpack.c.b16 %v1114, %v1110
    %v1387 = vpack.c.b16 %v1115, %v1111
    %v1388 = vpack.c.b16 %v1116, %v1112
    %v1389 = vpack.c.b16 %v1121, %v1117
    %v1390 = vpack.c.b16 %v1122, %v1118
    %v1391 = vpack.c.b16 %v1123, %v1119
    %v1392 = vpack.c.b16 %v1124, %v1120
    %v1393 = vpack.c.b16 %v1129, %v1125
    %v1394 = vpack.c.b16 %v1130, %v1126
    %v1395 = vpack.c.b16 %v1131, %v1127
    %v1396 = vpack.c.b16 %v1132, %v1128
    %v1397 = vpack.c.b16 %v1137, %v1133
    %v1398 = vpack.c.b16 %v1138, %v1134
    %v1399 = vpack.c.b16 %v1139, %v1135
    %v1400 = vpack.c.b16 %v1140, %v1136
    %v1401 = vpack.c.b16 %v1145, %v1141
    %v1402 = vpack.c.b16 %v1146, %v1142
    %v1403 = vpack.c.b16 %v1147, %v1143
    %v1404 = vpack.c.b16 %v1148, %v1144
    %1661 = vmatprep.subr.bf16.mxu0 %v1150
    %1662 = vmatpush1.bf16.msra.mxu0 %v1149
    %1663 = vmatprep.subr.bf16.mxu0 %v1154
    %1664 = vmatpush1.bf16.msra.mxu0 %v1153
    %1665 = vmatprep.subr.bf16.mxu0 %v1158
    %1666 = vmatpush1.bf16.msra.mxu0 %v1157
    %1667 = vmatprep.subr.bf16.mxu0 %v1162
    %1668 = vmatpush1.bf16.msra.mxu0 %v1161
    %1669 = vmatprep.subr.bf16.mxu0 %v1166
    %1670 = vmatpush1.bf16.msra.mxu0 %v1165
    %1671 = vmatprep.subr.bf16.mxu0 %v1170
    %1672 = vmatpush1.bf16.msra.mxu0 %v1169
    %1673 = vmatprep.subr.bf16.mxu0 %v1174
    %1674 = vmatpush1.bf16.msra.mxu0 %v1173
    %1675 = vmatprep.subr.bf16.mxu0 %v1178
    %1676 = vmatpush1.bf16.msra.mxu0 %v1177
    %1677 = vmatprep.subr.bf16.mxu0 %v1182
    %1678 = vmatpush1.bf16.msra.mxu0 %v1181
    %1679 = vmatprep.subr.bf16.mxu0 %v1186
    %1680 = vmatpush1.bf16.msra.mxu0 %v1185
    %1681 = vmatprep.subr.bf16.mxu0 %v1190
    %1682 = vmatpush1.bf16.msra.mxu0 %v1189
    %1683 = vmatprep.subr.bf16.mxu0 %v1194
    %1684 = vmatpush1.bf16.msra.mxu0 %v1193
    %1685 = vmatprep.subr.bf16.mxu0 %v1198
    %1686 = vmatpush1.bf16.msra.mxu0 %v1197
    %1687 = vmatprep.subr.bf16.mxu0 %v1202
    %1688 = vmatpush1.bf16.msra.mxu0 %v1201
    %1689 = vmatprep.subr.bf16.mxu0 %v1206
    %1690 = vmatpush1.bf16.msra.mxu0 %v1205
    %1691 = vmatprep.subr.bf16.mxu0 %v1210
    %1692 = vmatpush1.bf16.msra.mxu0 %v1209
    %1693 = vmatprep.mubr.bf16.mxu0 %v366
    %1694 = vmatmul.mubr.bf16.gmra.mrb[0].mxu0 %v365
    %v1695 = vpop.f32.mrb[0].mxu0
    %v1696 = vadd.f32 0.0, %v1695
    %v1697 = vpop.f32.mrb[0].mxu0
    %v1698 = vadd.f32 0.0, %v1697
    %v1699 = vpop.f32.mrb[0].mxu0
    %v1700 = vpop.f32.mrb[0].mxu0
    %1701 = vdwg.mxu0
    %1702 = vmatprep.subr.bf16.mxu0 %v1214
    %1703 = vmatpush1.bf16.msra.mxu0 %v1213
    %1704 = vmatprep.subr.bf16.mxu0 %v1218
    %1705 = vmatpush1.bf16.msra.mxu0 %v1217
    %1706 = vmatprep.subr.bf16.mxu0 %v1222
    %1707 = vmatpush1.bf16.msra.mxu0 %v1221
    %1708 = vmatprep.subr.bf16.mxu0 %v1226
    %1709 = vmatpush1.bf16.msra.mxu0 %v1225
    %1710 = vmatprep.subr.bf16.mxu0 %v1230
    %1711 = vmatpush1.bf16.msra.mxu0 %v1229
    %1712 = vmatprep.subr.bf16.mxu0 %v1234
    %1713 = vmatpush1.bf16.msra.mxu0 %v1233
    %1714 = vmatprep.subr.bf16.mxu0 %v1238
    %1715 = vmatpush1.bf16.msra.mxu0 %v1237
    %1716 = vmatprep.subr.bf16.mxu0 %v1242
    %1717 = vmatpush1.bf16.msra.mxu0 %v1241
    %1718 = vmatprep.subr.bf16.mxu0 %v1246
    %1719 = vmatpush1.bf16.msra.mxu0 %v1245
    %1720 = vmatprep.subr.bf16.mxu0 %v1250
    %1721 = vmatpush1.bf16.msra.mxu0 %v1249
    %1722 = vmatprep.subr.bf16.mxu0 %v1254
    %1723 = vmatpush1.bf16.msra.mxu0 %v1253
    %1724 = vmatprep.subr.bf16.mxu0 %v1258
    %1725 = vmatpush1.bf16.msra.mxu0 %v1257
    %1726 = vmatprep.subr.bf16.mxu0 %v1262
    %1727 = vmatpush1.bf16.msra.mxu0 %v1261
    %1728 = vmatprep.subr.bf16.mxu0 %v1266
    %1729 = vmatpush1.bf16.msra.mxu0 %v1265
    %1730 = vmatprep.subr.bf16.mxu0 %v1270
    %1731 = vmatpush1.bf16.msra.mxu0 %v1269
    %1732 = vmatprep.subr.bf16.mxu0 %v1274
    %1733 = vmatpush1.bf16.msra.mxu0 %v1273
    %1734 = vmatprep.mubr.bf16.mxu0 %v368
    %1735 = vmatmul.mubr.bf16.gmra.mrb[0].mxu0 %v367
    %v1736 = vpop.f32.mrb[0].mxu0
    %v1737 = vadd.f32 %v1696, %v1736
    %v1738 = vpop.f32.mrb[0].mxu0
    %v1739 = vadd.f32 %v1698, %v1738
    %v1740 = vpop.f32.mrb[0].mxu0
    %v1741 = vpop.f32.mrb[0].mxu0
    %1742 = vdwg.mxu0
    %1743 = vmatprep.subr.bf16.mxu0 %v1278
    %1744 = vmatpush1.bf16.msra.mxu0 %v1277
    %1745 = vmatprep.subr.bf16.mxu0 %v1282
    %1746 = vmatpush1.bf16.msra.mxu0 %v1281
    %1747 = vmatprep.subr.bf16.mxu0 %v1286
    %1748 = vmatpush1.bf16.msra.mxu0 %v1285
    %1749 = vmatprep.subr.bf16.mxu0 %v1290
    %1750 = vmatpush1.bf16.msra.mxu0 %v1289
    %1751 = vmatprep.subr.bf16.mxu0 %v1294
    %1752 = vmatpush1.bf16.msra.mxu0 %v1293
    %1753 = vmatprep.subr.bf16.mxu0 %v1298
    %1754 = vmatpush1.bf16.msra.mxu0 %v1297
    %1755 = vmatprep.subr.bf16.mxu0 %v1302
    %1756 = vmatpush1.bf16.msra.mxu0 %v1301
    %1757 = vmatprep.subr.bf16.mxu0 %v1306
    %1758 = vmatpush1.bf16.msra.mxu0 %v1305
    %1759 = vmatprep.subr.bf16.mxu0 %v1310
    %1760 = vmatpush1.bf16.msra.mxu0 %v1309
    %1761 = vmatprep.subr.bf16.mxu0 %v1314
    %1762 = vmatpush1.bf16.msra.mxu0 %v1313
    %1763 = vmatprep.subr.bf16.mxu0 %v1318
    %1764 = vmatpush1.bf16.msra.mxu0 %v1317
    %1765 = vmatprep.subr.bf16.mxu0 %v1322
    %1766 = vmatpush1.bf16.msra.mxu0 %v1321
    %1767 = vmatprep.subr.bf16.mxu0 %v1326
    %1768 = vmatpush1.bf16.msra.mxu0 %v1325
    %1769 = vmatprep.subr.bf16.mxu0 %v1330
    %1770 = vmatpush1.bf16.msra.mxu0 %v1329
    %1771 = vmatprep.subr.bf16.mxu0 %v1334
    %1772 = vmatpush1.bf16.msra.mxu0 %v1333
    %1773 = vmatprep.subr.bf16.mxu0 %v1338
    %1774 = vmatpush1.bf16.msra.mxu0 %v1337
    %1775 = vmatprep.mubr.bf16.mxu0 %v370
    %1776 = vmatmul.mubr.bf16.gmra.mrb[0].mxu0 %v369
    %v1777 = vpop.f32.mrb[0].mxu0
    %v1778 = vadd.f32 %v1737, %v1777
    %v1779 = vpop.f32.mrb[0].mxu0
    %v1780 = vadd.f32 %v1739, %v1779
    %v1781 = vpop.f32.mrb[0].mxu0
    %v1782 = vpop.f32.mrb[0].mxu0
    %1783 = vdwg.mxu0
    %1784 = vmatprep.subr.bf16.mxu0 %v1342
    %1785 = vmatpush1.bf16.msra.mxu0 %v1341
    %1786 = vmatprep.subr.bf16.mxu0 %v1346
    %1787 = vmatpush1.bf16.msra.mxu0 %v1345
    %1788 = vmatprep.subr.bf16.mxu0 %v1350
    %1789 = vmatpush1.bf16.msra.mxu0 %v1349
    %1790 = vmatprep.subr.bf16.mxu0 %v1354
    %1791 = vmatpush1.bf16.msra.mxu0 %v1353
    %1792 = vmatprep.subr.bf16.mxu0 %v1358
    %1793 = vmatpush1.bf16.msra.mxu0 %v1357
    %1794 = vmatprep.subr.bf16.mxu0 %v1362
    %1795 = vmatpush1.bf16.msra.mxu0 %v1361
    %1796 = vmatprep.subr.bf16.mxu0 %v1366
    %1797 = vmatpush1.bf16.msra.mxu0 %v1365
    %1798 = vmatprep.subr.bf16.mxu0 %v1370
    %1799 = vmatpush1.bf16.msra.mxu0 %v1369
    %1800 = vmatprep.subr.bf16.mxu0 %v1374
    %1801 = vmatpush1.bf16.msra.mxu0 %v1373
    %1802 = vmatprep.subr.bf16.mxu0 %v1378
    %1803 = vmatpush1.bf16.msra.mxu0 %v1377
    %1804 = vmatprep.subr.bf16.mxu0 %v1382
    %1805 = vmatpush1.bf16.msra.mxu0 %v1381
    %1806 = vmatprep.subr.bf16.mxu0 %v1386
    %1807 = vmatpush1.bf16.msra.mxu0 %v1385
    %1808 = vmatprep.subr.bf16.mxu0 %v1390
    %1809 = vmatpush1.bf16.msra.mxu0 %v1389
    %1810 = vmatprep.subr.bf16.mxu0 %v1394
    %1811 = vmatpush1.bf16.msra.mxu0 %v1393
    %1812 = vmatprep.subr.bf16.mxu0 %v1398
    %1813 = vmatpush1.bf16.msra.mxu0 %v1397
    %1814 = vmatprep.subr.bf16.mxu0 %v1402
    %1815 = vmatpush1.bf16.msra.mxu0 %v1401
    %1816 = vmatprep.mubr.bf16.mxu0 %v372
    %1817 = vmatmul.mubr.bf16.gmra.mrb[0].mxu0 %v371
    %v1818 = vpop.f32.mrb[0].mxu0
    %v1819 = vadd.f32 %v1778, %v1818
    %v1820 = vpop.f32.mrb[0].mxu0
    %v1821 = vadd.f32 %v1780, %v1820
    %v1822 = vpop.f32.mrb[0].mxu0
    %v1823 = vpop.f32.mrb[0].mxu0
    %1824 = vdwg.mxu0
    %1825 = vmatprep.subr.bf16.mxu0 %v1152
    %1826 = vmatpush1.bf16.msra.mxu0 %v1151
    %1827 = vmatprep.subr.bf16.mxu0 %v1156
    %1828 = vmatpush1.bf16.msra.mxu0 %v1155
    %1829 = vmatprep.subr.bf16.mxu0 %v1160
    %1830 = vmatpush1.bf16.msra.mxu0 %v1159
    %1831 = vmatprep.subr.bf16.mxu0 %v1164
    %1832 = vmatpush1.bf16.msra.mxu0 %v1163
    %1833 = vmatprep.subr.bf16.mxu0 %v1168
    %1834 = vmatpush1.bf16.msra.mxu0 %v1167
    %1835 = vmatprep.subr.bf16.mxu0 %v1172
    %1836 = vmatpush1.bf16.msra.mxu0 %v1171
    %1837 = vmatprep.subr.bf16.mxu0 %v1176
    %1838 = vmatpush1.bf16.msra.mxu0 %v1175
    %1839 = vmatprep.subr.bf16.mxu0 %v1180
    %1840 = vmatpush1.bf16.msra.mxu0 %v1179
    %1841 = vmatprep.subr.bf16.mxu0 %v1184
    %1842 = vmatpush1.bf16.msra.mxu0 %v1183
    %1843 = vmatprep.subr.bf16.mxu0 %v1188
    %1844 = vmatpush1.bf16.msra.mxu0 %v1187
    %1845 = vmatprep.subr.bf16.mxu0 %v1192
    %1846 = vmatpush1.bf16.msra.mxu0 %v1191
    %1847 = vmatprep.subr.bf16.mxu0 %v1196
    %1848 = vmatpush1.bf16.msra.mxu0 %v1195
    %1849 = vmatprep.subr.bf16.mxu0 %v1200
    %1850 = vmatpush1.bf16.msra.mxu0 %v1199
    %1851 = vmatprep.subr.bf16.mxu0 %v1204
    %1852 = vmatpush1.bf16.msra.mxu0 %v1203
    %1853 = vmatprep.subr.bf16.mxu0 %v1208
    %1854 = vmatpush1.bf16.msra.mxu0 %v1207
    %1855 = vmatprep.subr.bf16.mxu0 %v1212
    %1856 = vmatpush1.bf16.msra.mxu0 %v1211
    %1857 = vmatprep.mubr.bf16.mxu0 %v366
    %1858 = vmatmul.mubr.bf16.gmra.mrb[0].mxu0 %v365
    %v1859 = vpop.f32.mrb[0].mxu0
    %v1860 = vadd.f32 0.0, %v1859
    %v1861 = vpop.f32.mrb[0].mxu0
    %v1862 = vadd.f32 0.0, %v1861
    %v1863 = vpop.f32.mrb[0].mxu0
    %v1864 = vpop.f32.mrb[0].mxu0
    %1865 = vdwg.mxu0
    %1866 = vmatprep.subr.bf16.mxu0 %v1216
    %1867 = vmatpush1.bf16.msra.mxu0 %v1215
    %1868 = vmatprep.subr.bf16.mxu0 %v1220
    %1869 = vmatpush1.bf16.msra.mxu0 %v1219
    %1870 = vmatprep.subr.bf16.mxu0 %v1224
    %1871 = vmatpush1.bf16.msra.mxu0 %v1223
    %1872 = vmatprep.subr.bf16.mxu0 %v1228
    %1873 = vmatpush1.bf16.msra.mxu0 %v1227
    %1874 = vmatprep.subr.bf16.mxu0 %v1232
    %1875 = vmatpush1.bf16.msra.mxu0 %v1231
    %1876 = vmatprep.subr.bf16.mxu0 %v1236
    %1877 = vmatpush1.bf16.msra.mxu0 %v1235
    %1878 = vmatprep.subr.bf16.mxu0 %v1240
    %1879 = vmatpush1.bf16.msra.mxu0 %v1239
    %1880 = vmatprep.subr.bf16.mxu0 %v1244
    %1881 = vmatpush1.bf16.msra.mxu0 %v1243
    %1882 = vmatprep.subr.bf16.mxu0 %v1248
    %1883 = vmatpush1.bf16.msra.mxu0 %v1247
    %1884 = vmatprep.subr.bf16.mxu0 %v1252
    %1885 = vmatpush1.bf16.msra.mxu0 %v1251
    %1886 = vmatprep.subr.bf16.mxu0 %v1256
    %1887 = vmatpush1.bf16.msra.mxu0 %v1255
    %1888 = vmatprep.subr.bf16.mxu0 %v1260
    %1889 = vmatpush1.bf16.msra.mxu0 %v1259
    %1890 = vmatprep.subr.bf16.mxu0 %v1264
    %1891 = vmatpush1.bf16.msra.mxu0 %v1263
    %1892 = vmatprep.subr.bf16.mxu0 %v1268
    %1893 = vmatpush1.bf16.msra.mxu0 %v1267
    %1894 = vmatprep.subr.bf16.mxu0 %v1272
    %1895 = vmatpush1.bf16.msra.mxu0 %v1271
    %1896 = vmatprep.subr.bf16.mxu0 %v1276
    %1897 = vmatpush1.bf16.msra.mxu0 %v1275
    %1898 = vmatprep.mubr.bf16.mxu0 %v368
    %1899 = vmatmul.mubr.bf16.gmra.mrb[0].mxu0 %v367
    %v1900 = vpop.f32.mrb[0].mxu0
    %v1901 = vadd.f32 %v1860, %v1900
    %v1902 = vpop.f32.mrb[0].mxu0
    %v1903 = vadd.f32 %v1862, %v1902
    %v1904 = vpop.f32.mrb[0].mxu0
    %v1905 = vpop.f32.mrb[0].mxu0
    %1906 = vdwg.mxu0
    %1907 = vmatprep.subr.bf16.mxu0 %v1280
    %1908 = vmatpush1.bf16.msra.mxu0 %v1279
    %1909 = vmatprep.subr.bf16.mxu0 %v1284
    %1910 = vmatpush1.bf16.msra.mxu0 %v1283
    %1911 = vmatprep.subr.bf16.mxu0 %v1288
    %1912 = vmatpush1.bf16.msra.mxu0 %v1287
    %1913 = vmatprep.subr.bf16.mxu0 %v1292
    %1914 = vmatpush1.bf16.msra.mxu0 %v1291
    %1915 = vmatprep.subr.bf16.mxu0 %v1296
    %1916 = vmatpush1.bf16.msra.mxu0 %v1295
    %1917 = vmatprep.subr.bf16.mxu0 %v1300
    %1918 = vmatpush1.bf16.msra.mxu0 %v1299
    %1919 = vmatprep.subr.bf16.mxu0 %v1304
    %1920 = vmatpush1.bf16.msra.mxu0 %v1303
    %1921 = vmatprep.subr.bf16.mxu0 %v1308
    %1922 = vmatpush1.bf16.msra.mxu0 %v1307
    %1923 = vmatprep.subr.bf16.mxu0 %v1312
    %1924 = vmatpush1.bf16.msra.mxu0 %v1311
    %1925 = vmatprep.subr.bf16.mxu0 %v1316
    %1926 = vmatpush1.bf16.msra.mxu0 %v1315
    %1927 = vmatprep.subr.bf16.mxu0 %v1320
    %1928 = vmatpush1.bf16.msra.mxu0 %v1319
    %1929 = vmatprep.subr.bf16.mxu0 %v1324
    %1930 = vmatpush1.bf16.msra.mxu0 %v1323
    %1931 = vmatprep.subr.bf16.mxu0 %v1328
    %1932 = vmatpush1.bf16.msra.mxu0 %v1327
    %1933 = vmatprep.subr.bf16.mxu0 %v1332
    %1934 = vmatpush1.bf16.msra.mxu0 %v1331
    %1935 = vmatprep.subr.bf16.mxu0 %v1336
    %1936 = vmatpush1.bf16.msra.mxu0 %v1335
    %1937 = vmatprep.subr.bf16.mxu0 %v1340
    %1938 = vmatpush1.bf16.msra.mxu0 %v1339
    %1939 = vmatprep.mubr.bf16.mxu0 %v370
    %1940 = vmatmul.mubr.bf16.gmra.mrb[0].mxu0 %v369
    %v1941 = vpop.f32.mrb[0].mxu0
    %v1942 = vadd.f32 %v1901, %v1941
    %v1943 = vpop.f32.mrb[0].mxu0
    %v1944 = vadd.f32 %v1903, %v1943
    %v1945 = vpop.f32.mrb[0].mxu0
    %v1946 = vpop.f32.mrb[0].mxu0
    %1947 = vdwg.mxu0
    %1948 = vmatprep.subr.bf16.mxu0 %v1344
    %1949 = vmatpush1.bf16.msra.mxu0 %v1343
    %1950 = vmatprep.subr.bf16.mxu0 %v1348
    %1951 = vmatpush1.bf16.msra.mxu0 %v1347
    %1952 = vmatprep.subr.bf16.mxu0 %v1352
    %1953 = vmatpush1.bf16.msra.mxu0 %v1351
    %1954 = vmatprep.subr.bf16.mxu0 %v1356
    %1955 = vmatpush1.bf16.msra.mxu0 %v1355
    %1956 = vmatprep.subr.bf16.mxu0 %v1360
    %1957 = vmatpush1.bf16.msra.mxu0 %v1359
    %1958 = vmatprep.subr.bf16.mxu0 %v1364
    %1959 = vmatpush1.bf16.msra.mxu0 %v1363
    %1960 = vmatprep.subr.bf16.mxu0 %v1368
    %1961 = vmatpush1.bf16.msra.mxu0 %v1367
    %1962 = vmatprep.subr.bf16.mxu0 %v1372
    %1963 = vmatpush1.bf16.msra.mxu0 %v1371
    %1964 = vmatprep.subr.bf16.mxu0 %v1376
    %1965 = vmatpush1.bf16.msra.mxu0 %v1375
    %1966 = vmatprep.subr.bf16.mxu0 %v1380
    %1967 = vmatpush1.bf16.msra.mxu0 %v1379
    %1968 = vmatprep.subr.bf16.mxu0 %v1384
    %1969 = vmatpush1.bf16.msra.mxu0 %v1383
    %1970 = vmatprep.subr.bf16.mxu0 %v1388
    %1971 = vmatpush1.bf16.msra.mxu0 %v1387
    %1972 = vmatprep.subr.bf16.mxu0 %v1392
    %1973 = vmatpush1.bf16.msra.mxu0 %v1391
    %1974 = vmatprep.subr.bf16.mxu0 %v1396
    %1975 = vmatpush1.bf16.msra.mxu0 %v1395
    %1976 = vmatprep.subr.bf16.mxu0 %v1400
    %1977 = vmatpush1.bf16.msra.mxu0 %v1399
    %1978 = vmatprep.subr.bf16.mxu0 %v1404
    %1979 = vmatpush1.bf16.msra.mxu0 %v1403
    %1980 = vmatprep.mubr.bf16.mxu0 %v372
    %1981 = vmatmul.mubr.bf16.gmra.mrb[0].mxu0 %v371
    %v1982 = vpop.f32.mrb[0].mxu0
    %v1983 = vadd.f32 %v1942, %v1982
    %v1984 = vpop.f32.mrb[0].mxu0
    %v1985 = vadd.f32 %v1944, %v1984
    %v1986 = vpop.f32.mrb[0].mxu0
    %v1987 = vpop.f32.mrb[0].mxu0
    %1988 = vdwg.mxu0
    %v1989 = vadd.f32 %v89, %v1819
    %v1990 = vadd.f32 %v90, %v1821
    %v1991 = vadd.f32 %v91, %v1983
    %v1992 = vadd.f32 %v92, %v1985
    %1993 = vst [vmem:[#allocation2] sm:$0xff] %v1989
    %1994 = vst [vmem:[#allocation2 + $0x8] sm:$0xff] %v1990
    %1995 = vst [vmem:[#allocation2 + $0x10] sm:$0xff] %v1991
    %1996 = vst [vmem:[#allocation2 + $0x18] sm:$0xff] %v1992
    // Predicated region
    $region50: #{tpu_custom_call.1} parent=1 // pred_check
      %p1997 = pneg %p81
    $region51: #{tpu_custom_call.1} parent=1 // pred_check_branch
      %1999 = sbr.rel (%p1997) target = $region53
    $region52: #{tpu_custom_call.1} parent=1 // pred_region
      %v2000 = vld [vmem:[#allocation2] sm:$0xff]
      %v2001 = vld [vmem:[#allocation2 + $0x8] sm:$0xff]
      %v2002 = vld [vmem:[#allocation2 + $0x10] sm:$0xff]
      %v2003 = vld [vmem:[#allocation2 + $0x18] sm:$0xff]
      %v2004 = vld [vmem:[%s2] sm:$0xf]
      %v2006 = vlaneseq
      %v2007 = vshrl.u32 %v2006, 7
      %v2008 = vsub.s32 0, %v2007
      %v2009 = vrot.slane %v2004, %v2008
      %v2010 = vlaneseq
      %v2011 = vshrl.u32 %v2010, 7
      %v2012 = vsub.s32 1, %v2011
      %v2013 = vrot.slane %v2004, %v2012
      %v2014 = vlaneseq
      %v2015 = vshrl.u32 %v2014, 7
      %v2016 = vsub.s32 2, %v2015
      %v2017 = vrot.slane %v2004, %v2016
      %v2018 = vlaneseq
      %v2019 = vshrl.u32 %v2018, 7
      %v2020 = vsub.s32 3, %v2019
      %v2021 = vrot.slane %v2004, %v2020
      %v2026 = vadd.f32 %v2000, %v2009
      %v2027 = vadd.f32 %v2001, %v2013
      %v2028 = vadd.f32 %v2002, %v2017
      %v2029 = vadd.f32 %v2003, %v2021
      %vm2030 = vcmp.gt.f32.partialorder %v2026, 0.0
      %vm2031 = vcmp.gt.f32.partialorder %v2027, 0.0
      %vm2032 = vcmp.gt.f32.partialorder %v2028, 0.0
      %vm2033 = vcmp.gt.f32.partialorder %v2029, 0.0
      %v2034 = vmul.f32 %v2026, 0.2
      %v2035 = vmul.f32 %v2027, 0.2
      %v2036 = vmul.f32 %v2028, 0.2
      %v2037 = vmul.f32 %v2029, 0.2
      %v2038 = vsel %vm2030, %v2026, %v2034
      %v2039 = vsel %vm2031, %v2027, %v2035
      %v2040 = vsel %vm2032, %v2028, %v2036
      %v2041 = vsel %vm2033, %v2029, %v2037
      %v2042 = vpack.c.bf16 %v2038, %v2038
      %v2043 = vpack.c.bf16 %v2039, %v2039
      %v2044 = vpack.c.bf16 %v2040, %v2040
      %v2045 = vpack.c.bf16 %v2041, %v2041
      %v2046 = vld [vmem:[#allocation8] sm:$0xff]
      %v2047 = vld [vmem:[#allocation8 + $0x8] sm:$0xff]
      %v2048 = vld [vmem:[#allocation8 + $0x10] sm:$0xff]
      %v2049 = vld [vmem:[#allocation8 + $0x18] sm:$0xff]
      %v2050 = vld [vmem:[#allocation8 + $0x20] sm:$0xff]
      %v2051 = vld [vmem:[#allocation8 + $0x28] sm:$0xff]
      %v2052 = vld [vmem:[#allocation8 + $0x30] sm:$0xff]
      %v2053 = vld [vmem:[#allocation8 + $0x38] sm:$0xff]
      %v2054 = vld [vmem:[#allocation8 + $0x40] sm:$0xff]
      %v2055 = vld [vmem:[#allocation8 + $0x48] sm:$0xff]
      %v2056 = vld [vmem:[#allocation8 + $0x50] sm:$0xff]
      %v2057 = vld [vmem:[#allocation8 + $0x58] sm:$0xff]
      %v2058 = vld [vmem:[#allocation8 + $0x60] sm:$0xff]
      %v2059 = vld [vmem:[#allocation8 + $0x68] sm:$0xff]
      %v2060 = vld [vmem:[#allocation8 + $0x70] sm:$0xff]
      %v2061 = vld [vmem:[#allocation8 + $0x78] sm:$0xff]
      %v2062 = vld [vmem:[#allocation8 + $0x80] sm:$0xff]
      %v2063 = vld [vmem:[#allocation8 + $0x88] sm:$0xff]
      %v2064 = vld [vmem:[#allocation8 + $0x90] sm:$0xff]
      %v2065 = vld [vmem:[#allocation8 + $0x98] sm:$0xff]
      %v2066 = vld [vmem:[#allocation8 + $0xa0] sm:$0xff]
      %v2067 = vld [vmem:[#allocation8 + $0xa8] sm:$0xff]
      %v2068 = vld [vmem:[#allocation8 + $0xb0] sm:$0xff]
      %v2069 = vld [vmem:[#allocation8 + $0xb8] sm:$0xff]
      %v2070 = vld [vmem:[#allocation8 + $0xc0] sm:$0xff]
      %v2071 = vld [vmem:[#allocation8 + $0xc8] sm:$0xff]
      %v2072 = vld [vmem:[#allocation8 + $0xd0] sm:$0xff]
      %v2073 = vld [vmem:[#allocation8 + $0xd8] sm:$0xff]
      %v2074 = vld [vmem:[#allocation8 + $0xe0] sm:$0xff]
      %v2075 = vld [vmem:[#allocation8 + $0xe8] sm:$0xff]
      %v2076 = vld [vmem:[#allocation8 + $0xf0] sm:$0xff]
      %v2077 = vld [vmem:[#allocation8 + $0xf8] sm:$0xff]
      %v2078 = vld [vmem:[#allocation8 + $0x100] sm:$0xff]
      %v2079 = vld [vmem:[#allocation8 + $0x108] sm:$0xff]
      %v2080 = vld [vmem:[#allocation8 + $0x110] sm:$0xff]
      %v2081 = vld [vmem:[#allocation8 + $0x118] sm:$0xff]
      %v2082 = vld [vmem:[#allocation8 + $0x120] sm:$0xff]
      %v2083 = vld [vmem:[#allocation8 + $0x128] sm:$0xff]
      %v2084 = vld [vmem:[#allocation8 + $0x130] sm:$0xff]
      %v2085 = vld [vmem:[#allocation8 + $0x138] sm:$0xff]
      %v2086 = vld [vmem:[#allocation8 + $0x140] sm:$0xff]
      %v2087 = vld [vmem:[#allocation8 + $0x148] sm:$0xff]
      %v2088 = vld [vmem:[#allocation8 + $0x150] sm:$0xff]
      %v2089 = vld [vmem:[#allocation8 + $0x158] sm:$0xff]
      %v2090 = vld [vmem:[#allocation8 + $0x160] sm:$0xff]
      %v2091 = vld [vmem:[#allocation8 + $0x168] sm:$0xff]
      %v2092 = vld [vmem:[#allocation8 + $0x170] sm:$0xff]
      %v2093 = vld [vmem:[#allocation8 + $0x178] sm:$0xff]
      %v2094 = vld [vmem:[#allocation8 + $0x180] sm:$0xff]
      %v2095 = vld [vmem:[#allocation8 + $0x188] sm:$0xff]
      %v2096 = vld [vmem:[#allocation8 + $0x190] sm:$0xff]
      %v2097 = vld [vmem:[#allocation8 + $0x198] sm:$0xff]
      %v2098 = vld [vmem:[#allocation8 + $0x1a0] sm:$0xff]
      %v2099 = vld [vmem:[#allocation8 + $0x1a8] sm:$0xff]
      %v2100 = vld [vmem:[#allocation8 + $0x1b0] sm:$0xff]
      %v2101 = vld [vmem:[#allocation8 + $0x1b8] sm:$0xff]
      %v2102 = vld [vmem:[#allocation8 + $0x1c0] sm:$0xff]
      %v2103 = vld [vmem:[#allocation8 + $0x1c8] sm:$0xff]
      %v2104 = vld [vmem:[#allocation8 + $0x1d0] sm:$0xff]
      %v2105 = vld [vmem:[#allocation8 + $0x1d8] sm:$0xff]
      %v2106 = vld [vmem:[#allocation8 + $0x1e0] sm:$0xff]
      %v2107 = vld [vmem:[#allocation8 + $0x1e8] sm:$0xff]
      %v2108 = vld [vmem:[#allocation8 + $0x1f0] sm:$0xff]
      %v2109 = vld [vmem:[#allocation8 + $0x1f8] sm:$0xff]
      %v2110 = vld [vmem:[%s4] sm:$0x3]
      %v2112 = vlaneseq
      %v2113 = vshrl.u32 %v2112, 7
      %v2114 = vsub.s32 0, %v2113
      %v2115 = vrot.slane %v2110, %v2114
      %v2116 = vlaneseq
      %v2117 = vshrl.u32 %v2116, 7
      %v2118 = vsub.s32 1, %v2117
      %v2119 = vrot.slane %v2110, %v2118
      %v2186 = vunpack.c.l.b16 %v2046
      %v2187 = vunpack.c.h.b16 %v2046
      %v2188 = vunpack.c.l.b16 %v2047
      %v2189 = vunpack.c.h.b16 %v2047
      %v2190 = vunpack.c.l.b16 %v2048
      %v2191 = vunpack.c.h.b16 %v2048
      %v2192 = vunpack.c.l.b16 %v2049
      %v2193 = vunpack.c.h.b16 %v2049
      %v2194 = vunpack.c.l.b16 %v2050
      %v2195 = vunpack.c.h.b16 %v2050
      %v2196 = vunpack.c.l.b16 %v2051
      %v2197 = vunpack.c.h.b16 %v2051
      %v2198 = vunpack.c.l.b16 %v2052
      %v2199 = vunpack.c.h.b16 %v2052
      %v2200 = vunpack.c.l.b16 %v2053
      %v2201 = vunpack.c.h.b16 %v2053
      %v2202 = vunpack.c.l.b16 %v2054
      %v2203 = vunpack.c.h.b16 %v2054
      %v2204 = vunpack.c.l.b16 %v2055
      %v2205 = vunpack.c.h.b16 %v2055
      %v2206 = vunpack.c.l.b16 %v2056
      %v2207 = vunpack.c.h.b16 %v2056
      %v2208 = vunpack.c.l.b16 %v2057
      %v2209 = vunpack.c.h.b16 %v2057
      %v2210 = vunpack.c.l.b16 %v2058
      %v2211 = vunpack.c.h.b16 %v2058
      %v2212 = vunpack.c.l.b16 %v2059
      %v2213 = vunpack.c.h.b16 %v2059
      %v2214 = vunpack.c.l.b16 %v2060
      %v2215 = vunpack.c.h.b16 %v2060
      %v2216 = vunpack.c.l.b16 %v2061
      %v2217 = vunpack.c.h.b16 %v2061
      %v2218 = vunpack.c.l.b16 %v2062
      %v2219 = vunpack.c.h.b16 %v2062
      %v2220 = vunpack.c.l.b16 %v2063
      %v2221 = vunpack.c.h.b16 %v2063
      %v2222 = vunpack.c.l.b16 %v2064
      %v2223 = vunpack.c.h.b16 %v2064
      %v2224 = vunpack.c.l.b16 %v2065
      %v2225 = vunpack.c.h.b16 %v2065
      %v2226 = vunpack.c.l.b16 %v2066
      %v2227 = vunpack.c.h.b16 %v2066
      %v2228 = vunpack.c.l.b16 %v2067
      %v2229 = vunpack.c.h.b16 %v2067
      %v2230 = vunpack.c.l.b16 %v2068
      %v2231 = vunpack.c.h.b16 %v2068
      %v2232 = vunpack.c.l.b16 %v2069
      %v2233 = vunpack.c.h.b16 %v2069
      %v2234 = vunpack.c.l.b16 %v2070
      %v2235 = vunpack.c.h.b16 %v2070
      %v2236 = vunpack.c.l.b16 %v2071
      %v2237 = vunpack.c.h.b16 %v2071
      %v2238 = vunpack.c.l.b16 %v2072
      %v2239 = vunpack.c.h.b16 %v2072
      %v2240 = vunpack.c.l.b16 %v2073
      %v2241 = vunpack.c.h.b16 %v2073
      %v2242 = vunpack.c.l.b16 %v2074
      %v2243 = vunpack.c.h.b16 %v2074
      %v2244 = vunpack.c.l.b16 %v2075
      %v2245 = vunpack.c.h.b16 %v2075
      %v2246 = vunpack.c.l.b16 %v2076
      %v2247 = vunpack.c.h.b16 %v2076
      %v2248 = vunpack.c.l.b16 %v2077
      %v2249 = vunpack.c.h.b16 %v2077
      %v2250 = vunpack.c.l.b16 %v2078
      %v2251 = vunpack.c.h.b16 %v2078
      %v2252 = vunpack.c.l.b16 %v2079
      %v2253 = vunpack.c.h.b16 %v2079
      %v2254 = vunpack.c.l.b16 %v2080
      %v2255 = vunpack.c.h.b16 %v2080
      %v2256 = vunpack.c.l.b16 %v2081
      %v2257 = vunpack.c.h.b16 %v2081
      %v2258 = vunpack.c.l.b16 %v2082
      %v2259 = vunpack.c.h.b16 %v2082
      %v2260 = vunpack.c.l.b16 %v2083
      %v2261 = vunpack.c.h.b16 %v2083
      %v2262 = vunpack.c.l.b16 %v2084
      %v2263 = vunpack.c.h.b16 %v2084
      %v2264 = vunpack.c.l.b16 %v2085
      %v2265 = vunpack.c.h.b16 %v2085
      %v2266 = vunpack.c.l.b16 %v2086
      %v2267 = vunpack.c.h.b16 %v2086
      %v2268 = vunpack.c.l.b16 %v2087
      %v2269 = vunpack.c.h.b16 %v2087
      %v2270 = vunpack.c.l.b16 %v2088
      %v2271 = vunpack.c.h.b16 %v2088
      %v2272 = vunpack.c.l.b16 %v2089
      %v2273 = vunpack.c.h.b16 %v2089
      %v2274 = vunpack.c.l.b16 %v2090
      %v2275 = vunpack.c.h.b16 %v2090
      %v2276 = vunpack.c.l.b16 %v2091
      %v2277 = vunpack.c.h.b16 %v2091
      %v2278 = vunpack.c.l.b16 %v2092
      %v2279 = vunpack.c.h.b16 %v2092
      %v2280 = vunpack.c.l.b16 %v2093
      %v2281 = vunpack.c.h.b16 %v2093
      %v2282 = vunpack.c.l.b16 %v2094
      %v2283 = vunpack.c.h.b16 %v2094
      %v2284 = vunpack.c.l.b16 %v2095
      %v2285 = vunpack.c.h.b16 %v2095
      %v2286 = vunpack.c.l.b16 %v2096
      %v2287 = vunpack.c.h.b16 %v2096
      %v2288 = vunpack.c.l.b16 %v2097
      %v2289 = vunpack.c.h.b16 %v2097
      %v2290 = vunpack.c.l.b16 %v2098
      %v2291 = vunpack.c.h.b16 %v2098
      %v2292 = vunpack.c.l.b16 %v2099
      %v2293 = vunpack.c.h.b16 %v2099
      %v2294 = vunpack.c.l.b16 %v2100
      %v2295 = vunpack.c.h.b16 %v2100
      %v2296 = vunpack.c.l.b16 %v2101
      %v2297 = vunpack.c.h.b16 %v2101
      %v2298 = vunpack.c.l.b16 %v2102
      %v2299 = vunpack.c.h.b16 %v2102
      %v2300 = vunpack.c.l.b16 %v2103
      %v2301 = vunpack.c.h.b16 %v2103
      %v2302 = vunpack.c.l.b16 %v2104
      %v2303 = vunpack.c.h.b16 %v2104
      %v2304 = vunpack.c.l.b16 %v2105
      %v2305 = vunpack.c.h.b16 %v2105
      %v2306 = vunpack.c.l.b16 %v2106
      %v2307 = vunpack.c.h.b16 %v2106
      %v2308 = vunpack.c.l.b16 %v2107
      %v2309 = vunpack.c.h.b16 %v2107
      %v2310 = vunpack.c.l.b16 %v2108
      %v2311 = vunpack.c.h.b16 %v2108
      %v2312 = vunpack.c.l.b16 %v2109
      %v2313 = vunpack.c.h.b16 %v2109
      %v2314 = vpack.c.b16 %v2188, %v2186
      %v2315 = vpack.c.b16 %v2189, %v2187
      %v2316 = vpack.c.b16 %v2192, %v2190
      %v2317 = vpack.c.b16 %v2193, %v2191
      %v2318 = vpack.c.b16 %v2196, %v2194
      %v2319 = vpack.c.b16 %v2197, %v2195
      %v2320 = vpack.c.b16 %v2200, %v2198
      %v2321 = vpack.c.b16 %v2201, %v2199
      %v2322 = vpack.c.b16 %v2204, %v2202
      %v2323 = vpack.c.b16 %v2205, %v2203
      %v2324 = vpack.c.b16 %v2208, %v2206
      %v2325 = vpack.c.b16 %v2209, %v2207
      %v2326 = vpack.c.b16 %v2212, %v2210
      %v2327 = vpack.c.b16 %v2213, %v2211
      %v2328 = vpack.c.b16 %v2216, %v2214
      %v2329 = vpack.c.b16 %v2217, %v2215
      %v2330 = vpack.c.b16 %v2220, %v2218
      %v2331 = vpack.c.b16 %v2221, %v2219
      %v2332 = vpack.c.b16 %v2224, %v2222
      %v2333 = vpack.c.b16 %v2225, %v2223
      %v2334 = vpack.c.b16 %v2228, %v2226
      %v2335 = vpack.c.b16 %v2229, %v2227
      %v2336 = vpack.c.b16 %v2232, %v2230
      %v2337 = vpack.c.b16 %v2233, %v2231
      %v2338 = vpack.c.b16 %v2236, %v2234
      %v2339 = vpack.c.b16 %v2237, %v2235
      %v2340 = vpack.c.b16 %v2240, %v2238
      %v2341 = vpack.c.b16 %v2241, %v2239
      %v2342 = vpack.c.b16 %v2244, %v2242
      %v2343 = vpack.c.b16 %v2245, %v2243
      %v2344 = vpack.c.b16 %v2248, %v2246
      %v2345 = vpack.c.b16 %v2249, %v2247
      %v2346 = vpack.c.b16 %v2252, %v2250
      %v2347 = vpack.c.b16 %v2253, %v2251
      %v2348 = vpack.c.b16 %v2256, %v2254
      %v2349 = vpack.c.b16 %v2257, %v2255
      %v2350 = vpack.c.b16 %v2260, %v2258
      %v2351 = vpack.c.b16 %v2261, %v2259
      %v2352 = vpack.c.b16 %v2264, %v2262
      %v2353 = vpack.c.b16 %v2265, %v2263
      %v2354 = vpack.c.b16 %v2268, %v2266
      %v2355 = vpack.c.b16 %v2269, %v2267
      %v2356 = vpack.c.b16 %v2272, %v2270
      %v2357 = vpack.c.b16 %v2273, %v2271
      %v2358 = vpack.c.b16 %v2276, %v2274
      %v2359 = vpack.c.b16 %v2277, %v2275
      %v2360 = vpack.c.b16 %v2280, %v2278
      %v2361 = vpack.c.b16 %v2281, %v2279
      %v2362 = vpack.c.b16 %v2284, %v2282
      %v2363 = vpack.c.b16 %v2285, %v2283
      %v2364 = vpack.c.b16 %v2288, %v2286
      %v2365 = vpack.c.b16 %v2289, %v2287
      %v2366 = vpack.c.b16 %v2292, %v2290
      %v2367 = vpack.c.b16 %v2293, %v2291
      %v2368 = vpack.c.b16 %v2296, %v2294
      %v2369 = vpack.c.b16 %v2297, %v2295
      %v2370 = vpack.c.b16 %v2300, %v2298
      %v2371 = vpack.c.b16 %v2301, %v2299
      %v2372 = vpack.c.b16 %v2304, %v2302
      %v2373 = vpack.c.b16 %v2305, %v2303
      %v2374 = vpack.c.b16 %v2308, %v2306
      %v2375 = vpack.c.b16 %v2309, %v2307
      %v2376 = vpack.c.b16 %v2312, %v2310
      %v2377 = vpack.c.b16 %v2313, %v2311
      %2442 = vmatprep.subr.bf16.mxu0 %v2315
      %2443 = vmatpush1.bf16.msra.mxu0 %v2314
      %2444 = vmatprep.subr.bf16.mxu0 %v2317
      %2445 = vmatpush1.bf16.msra.mxu0 %v2316
      %2446 = vmatprep.subr.bf16.mxu0 %v2319
      %2447 = vmatpush1.bf16.msra.mxu0 %v2318
      %2448 = vmatprep.subr.bf16.mxu0 %v2321
      %2449 = vmatpush1.bf16.msra.mxu0 %v2320
      %2450 = vmatprep.subr.bf16.mxu0 %v2323
      %2451 = vmatpush1.bf16.msra.mxu0 %v2322
      %2452 = vmatprep.subr.bf16.mxu0 %v2325
      %2453 = vmatpush1.bf16.msra.mxu0 %v2324
      %2454 = vmatprep.subr.bf16.mxu0 %v2327
      %2455 = vmatpush1.bf16.msra.mxu0 %v2326
      %2456 = vmatprep.subr.bf16.mxu0 %v2329
      %2457 = vmatpush1.bf16.msra.mxu0 %v2328
      %2458 = vmatprep.subr.bf16.mxu0 %v2331
      %2459 = vmatpush1.bf16.msra.mxu0 %v2330
      %2460 = vmatprep.subr.bf16.mxu0 %v2333
      %2461 = vmatpush1.bf16.msra.mxu0 %v2332
      %2462 = vmatprep.subr.bf16.mxu0 %v2335
      %2463 = vmatpush1.bf16.msra.mxu0 %v2334
      %2464 = vmatprep.subr.bf16.mxu0 %v2337
      %2465 = vmatpush1.bf16.msra.mxu0 %v2336
      %2466 = vmatprep.subr.bf16.mxu0 %v2339
      %2467 = vmatpush1.bf16.msra.mxu0 %v2338
      %2468 = vmatprep.subr.bf16.mxu0 %v2341
      %2469 = vmatpush1.bf16.msra.mxu0 %v2340
      %2470 = vmatprep.subr.bf16.mxu0 %v2343
      %2471 = vmatpush1.bf16.msra.mxu0 %v2342
      %2472 = vmatprep.subr.bf16.mxu0 %v2345
      %2473 = vmatpush1.bf16.msra.mxu0 %v2344
      %2474 = vmatprep.mubr.bf16.mxu0 %v2043
      %2475 = vmatmul.mubr.bf16.gmra.mrb[0].mxu0 %v2042
      %v2476 = vpop.f32.mrb[0].mxu0
      %v2477 = vadd.f32 %v2115, %v2476
      %v2478 = vpop.f32.mrb[0].mxu0
      %v2479 = vadd.f32 %v2119, %v2478
      %v2480 = vpop.f32.mrb[0].mxu0
      %v2481 = vpop.f32.mrb[0].mxu0
      %2482 = vdwg.mxu0
      %2483 = vmatprep.subr.bf16.mxu0 %v2347
      %2484 = vmatpush1.bf16.msra.mxu0 %v2346
      %2485 = vmatprep.subr.bf16.mxu0 %v2349
      %2486 = vmatpush1.bf16.msra.mxu0 %v2348
      %2487 = vmatprep.subr.bf16.mxu0 %v2351
      %2488 = vmatpush1.bf16.msra.mxu0 %v2350
      %2489 = vmatprep.subr.bf16.mxu0 %v2353
      %2490 = vmatpush1.bf16.msra.mxu0 %v2352
      %2491 = vmatprep.subr.bf16.mxu0 %v2355
      %2492 = vmatpush1.bf16.msra.mxu0 %v2354
      %2493 = vmatprep.subr.bf16.mxu0 %v2357
      %2494 = vmatpush1.bf16.msra.mxu0 %v2356
      %2495 = vmatprep.subr.bf16.mxu0 %v2359
      %2496 = vmatpush1.bf16.msra.mxu0 %v2358
      %2497 = vmatprep.subr.bf16.mxu0 %v2361
      %2498 = vmatpush1.bf16.msra.mxu0 %v2360
      %2499 = vmatprep.subr.bf16.mxu0 %v2363
      %2500 = vmatpush1.bf16.msra.mxu0 %v2362
      %2501 = vmatprep.subr.bf16.mxu0 %v2365
      %2502 = vmatpush1.bf16.msra.mxu0 %v2364
      %2503 = vmatprep.subr.bf16.mxu0 %v2367
      %2504 = vmatpush1.bf16.msra.mxu0 %v2366
      %2505 = vmatprep.subr.bf16.mxu0 %v2369
      %2506 = vmatpush1.bf16.msra.mxu0 %v2368
      %2507 = vmatprep.subr.bf16.mxu0 %v2371
      %2508 = vmatpush1.bf16.msra.mxu0 %v2370
      %2509 = vmatprep.subr.bf16.mxu0 %v2373
      %2510 = vmatpush1.bf16.msra.mxu0 %v2372
      %2511 = vmatprep.subr.bf16.mxu0 %v2375
      %2512 = vmatpush1.bf16.msra.mxu0 %v2374
      %2513 = vmatprep.subr.bf16.mxu0 %v2377
      %2514 = vmatpush1.bf16.msra.mxu0 %v2376
      %2515 = vmatprep.mubr.bf16.mxu0 %v2045
      %2516 = vmatmul.mubr.bf16.gmra.mrb[0].mxu0 %v2044
      %v2517 = vpop.f32.mrb[0].mxu0
      %v2518 = vadd.f32 %v2477, %v2517
      %v2519 = vpop.f32.mrb[0].mxu0
      %v2520 = vadd.f32 %v2479, %v2519
      %v2521 = vpop.f32.mrb[0].mxu0
      %v2522 = vpop.f32.mrb[0].mxu0
      %2523 = vdwg.mxu0
      %vm2524 = vcmp.gt.f32.partialorder %v2518, 0.0
      %vm2525 = vcmp.gt.f32.partialorder %v2520, 0.0
      %v2526 = vmul.f32 %v2518, 0.2
      %v2527 = vmul.f32 %v2520, 0.2
      %v2528 = vsel %vm2524, %v2518, %v2526
      %v2529 = vsel %vm2525, %v2520, %v2527
      %v2530 = vpack.c.bf16 %v2528, %v2528
      %v2531 = vpack.c.bf16 %v2529, %v2529
      %v2532 = vld [vmem:[#allocation9] sm:$0xf]
      %v2533 = vld [vmem:[#allocation9 + $0x4] sm:$0xf]
      %v2534 = vld [vmem:[#allocation9 + $0x8] sm:$0xf]
      %v2535 = vld [vmem:[#allocation9 + $0xc] sm:$0xf]
      %v2536 = vld [vmem:[#allocation9 + $0x10] sm:$0xf]
      %v2537 = vld [vmem:[#allocation9 + $0x14] sm:$0xf]
      %v2538 = vld [vmem:[#allocation9 + $0x18] sm:$0xf]
      %v2539 = vld [vmem:[#allocation9 + $0x1c] sm:$0xf]
      %v2540 = vld [vmem:[#allocation9 + $0x20] sm:$0xf]
      %v2541 = vld [vmem:[#allocation9 + $0x24] sm:$0xf]
      %v2542 = vld [vmem:[#allocation9 + $0x28] sm:$0xf]
      %v2543 = vld [vmem:[#allocation9 + $0x2c] sm:$0xf]
      %v2544 = vld [vmem:[#allocation9 + $0x30] sm:$0xf]
      %v2545 = vld [vmem:[#allocation9 + $0x34] sm:$0xf]
      %v2546 = vld [vmem:[#allocation9 + $0x38] sm:$0xf]
      %v2547 = vld [vmem:[#allocation9 + $0x3c] sm:$0xf]
      %v2548 = vld [vmem:[#allocation9 + $0x40] sm:$0xf]
      %v2549 = vld [vmem:[#allocation9 + $0x44] sm:$0xf]
      %v2550 = vld [vmem:[#allocation9 + $0x48] sm:$0xf]
      %v2551 = vld [vmem:[#allocation9 + $0x4c] sm:$0xf]
      %v2552 = vld [vmem:[#allocation9 + $0x50] sm:$0xf]
      %v2553 = vld [vmem:[#allocation9 + $0x54] sm:$0xf]
      %v2554 = vld [vmem:[#allocation9 + $0x58] sm:$0xf]
      %v2555 = vld [vmem:[#allocation9 + $0x5c] sm:$0xf]
      %v2556 = vld [vmem:[#allocation9 + $0x60] sm:$0xf]
      %v2557 = vld [vmem:[#allocation9 + $0x64] sm:$0xf]
      %v2558 = vld [vmem:[#allocation9 + $0x68] sm:$0xf]
      %v2559 = vld [vmem:[#allocation9 + $0x6c] sm:$0xf]
      %v2560 = vld [vmem:[#allocation9 + $0x70] sm:$0xf]
      %v2561 = vld [vmem:[#allocation9 + $0x74] sm:$0xf]
      %v2562 = vld [vmem:[#allocation9 + $0x78] sm:$0xf]
      %v2563 = vld [vmem:[#allocation9 + $0x7c] sm:$0xf]
      %v2564 = vld [vmem:[%s6] sm:$0x1]
      %v2566 = vlaneseq
      %v2567 = vshrl.u32 %v2566, 7
      %v2568 = vsub.s32 0, %v2567
      %v2569 = vrot.slane %v2564, %v2568
      %v2603 = vunpack.c.l.b16 %v2532
      %v2604 = vunpack.c.l.b16 %v2533
      %v2605 = vunpack.c.l.b16 %v2534
      %v2606 = vunpack.c.l.b16 %v2535
      %v2607 = vunpack.c.l.b16 %v2536
      %v2608 = vunpack.c.l.b16 %v2537
      %v2609 = vunpack.c.l.b16 %v2538
      %v2610 = vunpack.c.l.b16 %v2539
      %v2611 = vunpack.c.l.b16 %v2540
      %v2612 = vunpack.c.l.b16 %v2541
      %v2613 = vunpack.c.l.b16 %v2542
      %v2614 = vunpack.c.l.b16 %v2543
      %v2615 = vunpack.c.l.b16 %v2544
      %v2616 = vunpack.c.l.b16 %v2545
      %v2617 = vunpack.c.l.b16 %v2546
      %v2618 = vunpack.c.l.b16 %v2547
      %v2619 = vunpack.c.l.b16 %v2548
      %v2620 = vunpack.c.l.b16 %v2549
      %v2621 = vunpack.c.l.b16 %v2550
      %v2622 = vunpack.c.l.b16 %v2551
      %v2623 = vunpack.c.l.b16 %v2552
      %v2624 = vunpack.c.l.b16 %v2553
      %v2625 = vunpack.c.l.b16 %v2554
      %v2626 = vunpack.c.l.b16 %v2555
      %v2627 = vunpack.c.l.b16 %v2556
      %v2628 = vunpack.c.l.b16 %v2557
      %v2629 = vunpack.c.l.b16 %v2558
      %v2630 = vunpack.c.l.b16 %v2559
      %v2631 = vunpack.c.l.b16 %v2560
      %v2632 = vunpack.c.l.b16 %v2561
      %v2633 = vunpack.c.l.b16 %v2562
      %v2634 = vunpack.c.l.b16 %v2563
      %v2635 = vpack.c.b16 %v2604, %v2603
      %v2636 = vpack.c.b16 %v2606, %v2605
      %v2637 = vpack.c.b16 %v2608, %v2607
      %v2638 = vpack.c.b16 %v2610, %v2609
      %v2639 = vpack.c.b16 %v2612, %v2611
      %v2640 = vpack.c.b16 %v2614, %v2613
      %v2641 = vpack.c.b16 %v2616, %v2615
      %v2642 = vpack.c.b16 %v2618, %v2617
      %v2643 = vpack.c.b16 %v2620, %v2619
      %v2644 = vpack.c.b16 %v2622, %v2621
      %v2645 = vpack.c.b16 %v2624, %v2623
      %v2646 = vpack.c.b16 %v2626, %v2625
      %v2647 = vpack.c.b16 %v2628, %v2627
      %v2648 = vpack.c.b16 %v2630, %v2629
      %v2649 = vpack.c.b16 %v2632, %v2631
      %v2650 = vpack.c.b16 %v2634, %v2633
      %2667 = vmatprep.subr.bf16.mxu0 0
      %2668 = vmatpush1.bf16.msra.mxu0 %v2635
      %2669 = vmatprep.subr.bf16.mxu0 0
      %2670 = vmatpush1.bf16.msra.mxu0 %v2636
      %2671 = vmatprep.subr.bf16.mxu0 0
      %2672 = vmatpush1.bf16.msra.mxu0 %v2637
      %2673 = vmatprep.subr.bf16.mxu0 0
      %2674 = vmatpush1.bf16.msra.mxu0 %v2638
      %2675 = vmatprep.subr.bf16.mxu0 0
      %2676 = vmatpush1.bf16.msra.mxu0 %v2639
      %2677 = vmatprep.subr.bf16.mxu0 0
      %2678 = vmatpush1.bf16.msra.mxu0 %v2640
      %2679 = vmatprep.subr.bf16.mxu0 0
      %2680 = vmatpush1.bf16.msra.mxu0 %v2641
      %2681 = vmatprep.subr.bf16.mxu0 0
      %2682 = vmatpush1.bf16.msra.mxu0 %v2642
      %2683 = vmatprep.subr.bf16.mxu0 0
      %2684 = vmatpush1.bf16.msra.mxu0 %v2643
      %2685 = vmatprep.subr.bf16.mxu0 0
      %2686 = vmatpush1.bf16.msra.mxu0 %v2644
      %2687 = vmatprep.subr.bf16.mxu0 0
      %2688 = vmatpush1.bf16.msra.mxu0 %v2645
      %2689 = vmatprep.subr.bf16.mxu0 0
      %2690 = vmatpush1.bf16.msra.mxu0 %v2646
      %2691 = vmatprep.subr.bf16.mxu0 0
      %2692 = vmatpush1.bf16.msra.mxu0 %v2647
      %2693 = vmatprep.subr.bf16.mxu0 0
      %2694 = vmatpush1.bf16.msra.mxu0 %v2648
      %2695 = vmatprep.subr.bf16.mxu0 0
      %2696 = vmatpush1.bf16.msra.mxu0 %v2649
      %2697 = vmatprep.subr.bf16.mxu0 0
      %2698 = vmatpush1.bf16.msra.mxu0 %v2650
      %2699 = vmatprep.mubr.bf16.mxu0 %v2531
      %2700 = vmatmul.mubr.bf16.gmra.mrb[0].mxu0 %v2530
      %v2701 = vpop.f32.mrb[0].mxu0
      %v2702 = vadd.f32 %v2569, %v2701
      %v2703 = vpop.f32.mrb[0].mxu0
      %v2704 = vpop.f32.mrb[0].mxu0
      %v2705 = vpop.f32.mrb[0].mxu0
      %2706 = vdwg.mxu0
      %2707 = vst [vmem:[#allocation11] sm:$0xff] %v2702
    $region53: #{tpu_custom_call.1} parent=1 // pred_fallthru
      _
    // Predicated region
    $region54: #{tpu_custom_call.1} parent=1 // pred_check
      _
    $region55: #{tpu_custom_call.1} parent=1 // pred_check_branch
      %2709 = sbr.rel (0) target = $region57
    $region56: #{tpu_custom_call.1} parent=1 // pred_region
      %s2711 = ssub.s32 128, 128
      %2712 = vsyncadd [#allocation5], %s2711
      %s2714 = sshll.u32 [#allocation11], 4
      %s2715 = int_to_ptr.vmem [resolvable:$true] %s2714
      %2717 = dma.vmem_to_hbm [thread:$0]  %s2715, 128, %s7, [#allocation5]
    $region57: #{tpu_custom_call.1} parent=1 // pred_fallthru
      _
    // Predicated region
    $region58: #{tpu_custom_call.1} parent=1 // pred_check
      _
    $region59: #{tpu_custom_call.1} parent=1 // pred_check_branch
      %2719 = sbr.rel (0) target = $region61
    $region60: #{tpu_custom_call.1} parent=1 // pred_region
      %2720 = dma.done [#allocation5], 128
    $region61: #{tpu_custom_call.1} parent=1 // pred_fallthru
      _
    %2721 = vsyncpa [#allocation4], 1
    %2722 = vsyncpa [#allocation7], 1
    %2723 = vsyncpa [#allocation10], 1
    %2724 = vsyncpa [#allocation5], 1

</llo_original>
